<compile_context>
chip_gen: v5e
topology: v5e:2x2
jax: 0.10.0
libtpu: 0.0.40
codegen_flags: <defaults>
</compile_context>

<pallas_src>
import math
import jax
import jax.numpy as jnp
from jax import lax
from jax.experimental import pallas as pl
from jax.experimental.pallas import tpu as pltpu

HIDDEN = 32
INPUT_SIZE = 1
NUM_LAYERS = 2  # kernel hard-codes the 2-layer stack, matching the module config


def lstm_fc_kernel(xT_ref, wih0_ref, whh0_ref, b0_ref,
                   w1_ref, b1_ref, wfc_ref, bfc_ref,
                   out_ref, gx_ref):
    T, B = xT_ref.shape
    H = whh0_ref.shape[0]
    G = 4 * H

    whh0 = whh0_ref[...]                              # (H, 4H)
    w1 = w1_ref[...]                                  # (2H, 4H)  == [W_ih1; W_hh1]
    b1 = b1_ref[...]                                  # (1, 4H)

    # --- Hoisted layer-0 input projection (input_size == 1 -> pure broadcast multiply). ---
    xT = xT_ref[...]                                  # (T, B)
    gx_ref[...] = (xT[:, :, None] * wih0_ref[...].reshape(1, 1, G)
                   + b0_ref[...].reshape(1, 1, G))    # (T, B, 4H)

    # tanh applies to the 'g' (cell-candidate) gate block [2H, 3H); sigmoid elsewhere.
    lane = lax.broadcasted_iota(jnp.int32, (B, G), 1)
    tanh_mask = (lane >= 2 * H) & (lane < 3 * H)

    def activate(g):
        # Full-width: 1 tanh + 1 sigmoid + 1 select over the whole (B, 4H) vreg.
        act = jnp.where(tanh_mask, jnp.tanh(g), jax.nn.sigmoid(g))
        i = act[:, 0 * H:1 * H]
        f = act[:, 1 * H:2 * H]
        gg = act[:, 2 * H:3 * H]
        o = act[:, 3 * H:4 * H]
        return i, f, gg, o

    def cell0(gx_t, h, c):
        g = gx_t + jnp.dot(h, whh0, preferred_element_type=jnp.float32)
        i, f, gg, o = activate(g)
        c_new = f * c + i * gg
        return o * jnp.tanh(c_new), c_new

    def cell1(h_below, h, c):
        hcat = jnp.concatenate([h_below, h], axis=1)              # (B, 2H)
        g = jnp.dot(hcat, w1, preferred_element_type=jnp.float32) + b1
        i, f, gg, o = activate(g)
        c_new = f * c + i * gg
        return o * jnp.tanh(c_new), c_new

    zeros = jnp.zeros((B, H), jnp.float32)            # h0/c0 init (torch.zeros)

    # Prologue: layer-0 step for t=0 (layer 1 has nothing to consume yet).
    h0, c0 = cell0(gx_ref[0], zeros, zeros)
    h1, c1 = zeros, zeros

    # Skewed main loop: at iteration t, layer 0 advances to time t while layer 1 consumes
    # h0_{t-1}; the two cells only read carry values, so they are independent within a step.
    # TODO(synk): nn.LSTM inter-layer dropout (p=0.2) is train-only; eval forward skips it.
    def step(t, carry):
        h0, c0, h1, c1 = carry
        h0_new, c0_new = cell0(gx_ref[t], h0, c0)     # layer 0, time t
        h1_new, c1_new = cell1(h0, h1, c1)            # layer 1, time t-1
        return (h0_new, c0_new, h1_new, c1_new)

    h0, c0, h1, c1 = lax.fori_loop(1, T, step, (h0, c0, h1, c1), unroll=True)

    # Epilogue: final layer-1 step consuming h0_{T-1}.
    h1, _ = cell1(h0, h1, c1)

    # fc(out[:, -1, :]) -> (B, 1)
    # (Last-dim-1 output is a masked store; negligible at small B. Would pad/return h1 at scale.)
    out_ref[...] = (jnp.dot(h1, wfc_ref[...], preferred_element_type=jnp.float32)
                    + bfc_ref[...])


def init_params(key, hidden_size=HIDDEN, input_size=INPUT_SIZE):
    """Deterministic init mimicking PyTorch's uniform(-1/sqrt(H), 1/sqrt(H))."""
    k = 1.0 / math.sqrt(hidden_size)
    keys = jax.random.split(key, 11)

    def u(kk, shape, bound):
        return jax.random.uniform(kk, shape, jnp.float32, -bound, bound)

    # PyTorch stores (4H, in) / (4H, H); gate order [i, f, g, o].
    w_ih0 = u(keys[0], (4 * hidden_size, input_size), k)
    w_hh0 = u(keys[1], (4 * hidden_size, hidden_size), k)
    b_ih0 = u(keys[2], (4 * hidden_size,), k)
    b_hh0 = u(keys[3], (4 * hidden_size,), k)
    w_ih1 = u(keys[4], (4 * hidden_size, hidden_size), k)
    w_hh1 = u(keys[5], (4 * hidden_size, hidden_size), k)
    b_ih1 = u(keys[6], (4 * hidden_size,), k)
    b_hh1 = u(keys[7], (4 * hidden_size,), k)
    w_fc = u(keys[8], (1, hidden_size), k)
    b_fc = u(keys[9], (1,), k)

    return dict(
        wih0=w_ih0.T,                                        # (1, 4H)
        whh0=w_hh0.T,                                        # (H, 4H)
        b0=(b_ih0 + b_hh0)[None, :],                         # (1, 4H)
        w1=jnp.concatenate([w_ih1.T, w_hh1.T], axis=0),      # (2H, 4H) stacked [W_ih1; W_hh1]
        b1=(b_ih1 + b_hh1)[None, :],                         # (1, 4H)
        wfc=w_fc.T,                                          # (H, 1)
        bfc=b_fc[None, :],                                   # (1, 1)
    )


def bit_counter_rnn_forward(x, params):
    B, T = x.shape
    H = HIDDEN
    vmem = pl.BlockSpec(memory_space=pltpu.MemorySpace.VMEM)
    args = (jnp.transpose(x),                       # (T, B): time on the leading (sublane) axis
            params["wih0"], params["whh0"], params["b0"],
            params["w1"], params["b1"],
            params["wfc"], params["bfc"])

    flops = 2 * T * B * (H * 4 * H) + 2 * T * B * (2 * H * 4 * H) + 2 * B * H
    transcendentals = T * B * 2 * (2 * 4 * H + H)
    bytes_accessed = 4 * (x.size + sum(int(p.size) for p in params.values()) + B)

    # NOTE: for large B, add a batch grid axis with dimension_semantics=("parallel",)
    # (2x on v7x megacore); at B=2 a single whole-array-VMEM invocation is optimal.
    return pl.pallas_call(
        lstm_fc_kernel,
        out_shape=jax.ShapeDtypeStruct((B, 1), jnp.float32),
        in_specs=[vmem] * len(args),
        out_specs=vmem,
        scratch_shapes=[pltpu.VMEM((T, B, 4 * H), jnp.float32)],  # hoisted layer-0 gates
        cost_estimate=pl.CostEstimate(flops=flops,
                                      transcendentals=transcendentals,
                                      bytes_accessed=bytes_accessed),
    )(*args)


def reference_forward(x, params):
    """Pure-JAX reference of the same forward pass (eval mode, no dropout), un-skewed."""
    B, T = x.shape
    H = HIDDEN

    def act(g):
        i = jax.nn.sigmoid(g[:, 0 * H:1 * H])
        f = jax.nn.sigmoid(g[:, 1 * H:2 * H])
        gg = jnp.tanh(g[:, 2 * H:3 * H])
        o = jax.nn.sigmoid(g[:, 3 * H:4 * H])
        return i, f, gg, o

    def scan_step(carry, x_t):
        h0, c0, h1, c1 = carry
        g0 = x_t[:, None] @ params["wih0"] + h0 @ params["whh0"] + params["b0"]
        i, f, gg, o = act(g0)
        c0 = f * c0 + i * gg
        h0 = o * jnp.tanh(c0)
        g1 = jnp.concatenate([h0, h1], axis=1) @ params["w1"] + params["b1"]
        i, f, gg, o = act(g1)
        c1 = f * c1 + i * gg
        h1 = o * jnp.tanh(c1)
        return (h0, c0, h1, c1), None

    z = jnp.zeros((B, H), jnp.float32)
    (h0, c0, h1, c1), _ = lax.scan(scan_step, (z, z, z, z), jnp.transpose(x))
    return h1 @ params["wfc"] + params["bfc"]


if __name__ == "__main__":
    key = jax.random.PRNGKey(0)
    k_param, k_x = jax.random.split(key)

    B, T = 2, 8  # batch of 2 bit-sequences of length 8
    params = init_params(k_param)
    # bit sequences (the "BitCounter" task feeds 0/1 floats)
    x = jax.random.bernoulli(k_x, 0.5, (B, T)).astype(jnp.float32)

    out = bit_counter_rnn_forward(x, params)
    out = jax.block_until_ready(out)

    ref = reference_forward(x, params)
    assert out.shape == (B, 1)
    assert jnp.allclose(out, ref, atol=1e-5, rtol=1e-5), (out, ref)

    print("KERNEL_OK")
</pallas_src>

<mosaic_0001>
module attributes {stable_mosaic.version = 11 : i64} {
  func.func @lstm_fc_kernel(%arg0: memref<8x2xf32, #tpu.memory_space<vmem>>, %arg1: memref<1x128xf32, #tpu.memory_space<vmem>>, %arg2: memref<32x128xf32, #tpu.memory_space<vmem>>, %arg3: memref<1x128xf32, #tpu.memory_space<vmem>>, %arg4: memref<64x128xf32, #tpu.memory_space<vmem>>, %arg5: memref<1x128xf32, #tpu.memory_space<vmem>>, %arg6: memref<32x1xf32, #tpu.memory_space<vmem>>, %arg7: memref<1x1xf32, #tpu.memory_space<vmem>>, %arg8: memref<2x1xf32, #tpu.memory_space<vmem>>, %arg9: memref<8x2x128xf32, #tpu.memory_space<vmem>>) attributes {dimension_semantics = [], scalar_prefetch = 0 : i64, scratch_operands = 1 : i64, tpu.core_type = #tpu.core_type<tc>} {
    %c0 = arith.constant 0 : index
    %c0_0 = arith.constant 0 : index
    %0 = vector.load %arg2[%c0, %c0_0] : memref<32x128xf32, #tpu.memory_space<vmem>>, vector<32x128xf32>
    %c0_1 = arith.constant 0 : index
    %c0_2 = arith.constant 0 : index
    %1 = vector.load %arg4[%c0_1, %c0_2] : memref<64x128xf32, #tpu.memory_space<vmem>>, vector<64x128xf32>
    %c0_3 = arith.constant 0 : index
    %c0_4 = arith.constant 0 : index
    %2 = vector.load %arg5[%c0_3, %c0_4] : memref<1x128xf32, #tpu.memory_space<vmem>>, vector<1x128xf32>
    %c0_5 = arith.constant 0 : index
    %c0_6 = arith.constant 0 : index
    %3 = vector.load %arg0[%c0_5, %c0_6] : memref<8x2xf32, #tpu.memory_space<vmem>>, vector<8x2xf32>
    %4 = vector.shape_cast %3 : vector<8x2xf32> to vector<8x2x1xf32>
    %c0_7 = arith.constant 0 : index
    %c0_8 = arith.constant 0 : index
    %5 = vector.load %arg1[%c0_7, %c0_8] : memref<1x128xf32, #tpu.memory_space<vmem>>, vector<1x128xf32>
    %6 = vector.shape_cast %5 : vector<1x128xf32> to vector<1x1x128xf32>
    %7 = vector.broadcast %4 : vector<8x2x1xf32> to vector<8x2x128xf32>
    %8 = vector.broadcast %6 : vector<1x1x128xf32> to vector<8x2x128xf32>
    %9 = arith.mulf %7, %8 : vector<8x2x128xf32>
    %c0_9 = arith.constant 0 : index
    %c0_10 = arith.constant 0 : index
    %10 = vector.load %arg3[%c0_9, %c0_10] : memref<1x128xf32, #tpu.memory_space<vmem>>, vector<1x128xf32>
    %11 = vector.shape_cast %10 : vector<1x128xf32> to vector<1x1x128xf32>
    %12 = vector.broadcast %11 : vector<1x1x128xf32> to vector<8x2x128xf32>
    %13 = arith.addf %9, %12 : vector<8x2x128xf32>
    %c0_11 = arith.constant 0 : index
    %c0_12 = arith.constant 0 : index
    %c0_13 = arith.constant 0 : index
    %14 = vector.load %arg9[%c0_11, %c0_12, %c0_13] : memref<8x2x128xf32, #tpu.memory_space<vmem>>, vector<8x2x128xf32>
    tpu.vector_store %arg9[%c0_11, %c0_12, %c0_13], %13 {strides = array<i32>} : memref<8x2x128xf32, #tpu.memory_space<vmem>>, vector<8x2x128xf32>,
    %15 = tpu.iota {dimensions = array<i32: 1>} : vector<2x128xi32>
    %c64_i32 = arith.constant 64 : i32
    %16 = vector.broadcast %c64_i32 : i32 to vector<2x128xi32>
    %17 = arith.cmpi sge, %15, %16 : vector<2x128xi32>
    %c96_i32 = arith.constant 96 : i32
    %18 = vector.broadcast %c96_i32 : i32 to vector<2x128xi32>
    %19 = arith.cmpi slt, %15, %18 : vector<2x128xi32>
    %20 = arith.andi %17, %19 : vector<2x128xi1>
    %cst = arith.constant 0.000000e+00 : f32
    %21 = vector.broadcast %cst : f32 to vector<2x32xf32>
    %c0_14 = arith.constant 0 : index
    %c0_15 = arith.constant 0 : index
    %c0_16 = arith.constant 0 : index
    %22 = vector.load %arg9[%c0_14, %c0_15, %c0_16] : memref<8x2x128xf32, #tpu.memory_space<vmem>>, vector<1x2x128xf32>
    %23 = vector.shape_cast %22 : vector<1x2x128xf32> to vector<2x128xf32>
    %cst_17 = arith.constant dense<0.000000e+00> : vector<2x128xf32>
    %24 = tpu.matmul %21, %0, %cst_17 {dimension_numbers = #tpu.dot_dimension_numbers<[1], [0], [0], [1], [0, 0, 1, 1], [], []>} : vector<2x32xf32>, vector<32x128xf32>, vector<2x128xf32> -> vector<2x128xf32>
    %25 = arith.addf %23, %24 : vector<2x128xf32>
    %26 = math.tanh %25 : vector<2x128xf32>
    %27 = arith.negf %25 : vector<2x128xf32>
    %28 = math.exp %27 : vector<2x128xf32>
    %cst_18 = arith.constant 1.000000e+00 : f32
    %29 = vector.broadcast %cst_18 : f32 to vector<2x128xf32>
    %30 = arith.addf %29, %28 : vector<2x128xf32>
    %31 = arith.divf %29, %30 : vector<2x128xf32>
    %32 = arith.select %20, %26, %31 : vector<2x128xi1>, vector<2x128xf32>
    %33 = vector.extract_strided_slice %32 {offsets = [0, 0], sizes = [2, 32], strides = [1, 1]} : vector<2x128xf32> to vector<2x32xf32>
    %34 = vector.extract_strided_slice %32 {offsets = [0, 32], sizes = [2, 32], strides = [1, 1]} : vector<2x128xf32> to vector<2x32xf32>
    %35 = vector.extract_strided_slice %32 {offsets = [0, 64], sizes = [2, 32], strides = [1, 1]} : vector<2x128xf32> to vector<2x32xf32>
    %36 = vector.extract_strided_slice %32 {offsets = [0, 96], sizes = [2, 32], strides = [1, 1]} : vector<2x128xf32> to vector<2x32xf32>
    %37 = arith.mulf %34, %21 : vector<2x32xf32>
    %38 = arith.mulf %33, %35 : vector<2x32xf32>
    %39 = arith.addf %37, %38 : vector<2x32xf32>
    %40 = math.tanh %39 : vector<2x32xf32>
    %41 = arith.mulf %36, %40 : vector<2x32xf32>
    %c1_i32 = arith.constant 1 : i32
    %42 = arith.index_cast %c1_i32 : i32 to index
    %c0_19 = arith.constant 0 : index
    %c0_20 = arith.constant 0 : index
    %43 = vector.load %arg9[%42, %c0_19, %c0_20] : memref<8x2x128xf32, #tpu.memory_space<vmem>>, vector<1x2x128xf32>
    %44 = vector.shape_cast %43 : vector<1x2x128xf32> to vector<2x128xf32>
    %cst_21 = arith.constant dense<0.000000e+00> : vector<2x128xf32>
    %45 = tpu.matmul %41, %0, %cst_21 {dimension_numbers = #tpu.dot_dimension_numbers<[1], [0], [0], [1], [0, 0, 1, 1], [], []>} : vector<2x32xf32>, vector<32x128xf32>, vector<2x128xf32> -> vector<2x128xf32>
    %46 = arith.addf %44, %45 : vector<2x128xf32>
    %47 = math.tanh %46 : vector<2x128xf32>
    %48 = arith.negf %46 : vector<2x128xf32>
    %49 = math.exp %48 : vector<2x128xf32>
    %cst_22 = arith.constant 1.000000e+00 : f32
    %50 = vector.broadcast %cst_22 : f32 to vector<2x128xf32>
    %51 = arith.addf %50, %49 : vector<2x128xf32>
    %52 = arith.divf %50, %51 : vector<2x128xf32>
    %53 = arith.select %20, %47, %52 : vector<2x128xi1>, vector<2x128xf32>
    %54 = vector.extract_strided_slice %53 {offsets = [0, 0], sizes = [2, 32], strides = [1, 1]} : vector<2x128xf32> to vector<2x32xf32>
    %55 = vector.extract_strided_slice %53 {offsets = [0, 32], sizes = [2, 32], strides = [1, 1]} : vector<2x128xf32> to vector<2x32xf32>
    %56 = vector.extract_strided_slice %53 {offsets = [0, 64], sizes = [2, 32], strides = [1, 1]} : vector<2x128xf32> to vector<2x32xf32>
    %57 = vector.extract_strided_slice %53 {offsets = [0, 96], sizes = [2, 32], strides = [1, 1]} : vector<2x128xf32> to vector<2x32xf32>
    %58 = arith.mulf %55, %39 : vector<2x32xf32>
    %59 = arith.mulf %54, %56 : vector<2x32xf32>
    %60 = arith.addf %58, %59 : vector<2x32xf32>
    %61 = math.tanh %60 : vector<2x32xf32>
    %62 = arith.mulf %57, %61 : vector<2x32xf32>
    %63 = tpu.concatenate %41, %21 in 1 : vector<2x32xf32>, vector<2x32xf32> -> vector<2x64xf32>
    %cst_23 = arith.constant dense<0.000000e+00> : vector<2x128xf32>
    %64 = tpu.matmul %63, %1, %cst_23 {dimension_numbers = #tpu.dot_dimension_numbers<[1], [0], [0], [1], [0, 0, 1, 1], [], []>} : vector<2x64xf32>, vector<64x128xf32>, vector<2x128xf32> -> vector<2x128xf32>
    %65 = vector.broadcast %2 : vector<1x128xf32> to vector<2x128xf32>
    %66 = arith.addf %64, %65 : vector<2x128xf32>
    %67 = math.tanh %66 : vector<2x128xf32>
    %68 = arith.negf %66 : vector<2x128xf32>
    %69 = math.exp %68 : vector<2x128xf32>
    %cst_24 = arith.constant 1.000000e+00 : f32
    %70 = vector.broadcast %cst_24 : f32 to vector<2x128xf32>
    %71 = arith.addf %70, %69 : vector<2x128xf32>
    %72 = arith.divf %70, %71 : vector<2x128xf32>
    %73 = arith.select %20, %67, %72 : vector<2x128xi1>, vector<2x128xf32>
    %74 = vector.extract_strided_slice %73 {offsets = [0, 0], sizes = [2, 32], strides = [1, 1]} : vector<2x128xf32> to vector<2x32xf32>
    %75 = vector.extract_strided_slice %73 {offsets = [0, 32], sizes = [2, 32], strides = [1, 1]} : vector<2x128xf32> to vector<2x32xf32>
    %76 = vector.extract_strided_slice %73 {offsets = [0, 64], sizes = [2, 32], strides = [1, 1]} : vector<2x128xf32> to vector<2x32xf32>
    %77 = vector.extract_strided_slice %73 {offsets = [0, 96], sizes = [2, 32], strides = [1, 1]} : vector<2x128xf32> to vector<2x32xf32>
    %78 = arith.mulf %75, %21 : vector<2x32xf32>
    %79 = arith.mulf %74, %76 : vector<2x32xf32>
    %80 = arith.addf %78, %79 : vector<2x32xf32>
    %81 = math.tanh %80 : vector<2x32xf32>
    %82 = arith.mulf %77, %81 : vector<2x32xf32>
    %c2_i32 = arith.constant 2 : i32
    %83 = arith.index_cast %c2_i32 : i32 to index
    %c0_25 = arith.constant 0 : index
    %c0_26 = arith.constant 0 : index
    %84 = vector.load %arg9[%83, %c0_25, %c0_26] : memref<8x2x128xf32, #tpu.memory_space<vmem>>, vector<1x2x128xf32>
    %85 = vector.shape_cast %84 : vector<1x2x128xf32> to vector<2x128xf32>
    %cst_27 = arith.constant dense<0.000000e+00> : vector<2x128xf32>
    %86 = tpu.matmul %62, %0, %cst_27 {dimension_numbers = #tpu.dot_dimension_numbers<[1], [0], [0], [1], [0, 0, 1, 1], [], []>} : vector<2x32xf32>, vector<32x128xf32>, vector<2x128xf32> -> vector<2x128xf32>
    %87 = arith.addf %85, %86 : vector<2x128xf32>
    %88 = math.tanh %87 : vector<2x128xf32>
    %89 = arith.negf %87 : vector<2x128xf32>
    %90 = math.exp %89 : vector<2x128xf32>
    %cst_28 = arith.constant 1.000000e+00 : f32
    %91 = vector.broadcast %cst_28 : f32 to vector<2x128xf32>
    %92 = arith.addf %91, %90 : vector<2x128xf32>
    %93 = arith.divf %91, %92 : vector<2x128xf32>
    %94 = arith.select %20, %88, %93 : vector<2x128xi1>, vector<2x128xf32>
    %95 = vector.extract_strided_slice %94 {offsets = [0, 0], sizes = [2, 32], strides = [1, 1]} : vector<2x128xf32> to vector<2x32xf32>
    %96 = vector.extract_strided_slice %94 {offsets = [0, 32], sizes = [2, 32], strides = [1, 1]} : vector<2x128xf32> to vector<2x32xf32>
    %97 = vector.extract_strided_slice %94 {offsets = [0, 64], sizes = [2, 32], strides = [1, 1]} : vector<2x128xf32> to vector<2x32xf32>
    %98 = vector.extract_strided_slice %94 {offsets = [0, 96], sizes = [2, 32], strides = [1, 1]} : vector<2x128xf32> to vector<2x32xf32>
    %99 = arith.mulf %96, %60 : vector<2x32xf32>
    %100 = arith.mulf %95, %97 : vector<2x32xf32>
    %101 = arith.addf %99, %100 : vector<2x32xf32>
    %102 = math.tanh %101 : vector<2x32xf32>
    %103 = arith.mulf %98, %102 : vector<2x32xf32>
    %104 = tpu.concatenate %62, %82 in 1 : vector<2x32xf32>, vector<2x32xf32> -> vector<2x64xf32>
    %cst_29 = arith.constant dense<0.000000e+00> : vector<2x128xf32>
    %105 = tpu.matmul %104, %1, %cst_29 {dimension_numbers = #tpu.dot_dimension_numbers<[1], [0], [0], [1], [0, 0, 1, 1], [], []>} : vector<2x64xf32>, vector<64x128xf32>, vector<2x128xf32> -> vector<2x128xf32>
    %106 = vector.broadcast %2 : vector<1x128xf32> to vector<2x128xf32>
    %107 = arith.addf %105, %106 : vector<2x128xf32>
    %108 = math.tanh %107 : vector<2x128xf32>
    %109 = arith.negf %107 : vector<2x128xf32>
    %110 = math.exp %109 : vector<2x128xf32>
    %cst_30 = arith.constant 1.000000e+00 : f32
    %111 = vector.broadcast %cst_30 : f32 to vector<2x128xf32>
    %112 = arith.addf %111, %110 : vector<2x128xf32>
    %113 = arith.divf %111, %112 : vector<2x128xf32>
    %114 = arith.select %20, %108, %113 : vector<2x128xi1>, vector<2x128xf32>
    %115 = vector.extract_strided_slice %114 {offsets = [0, 0], sizes = [2, 32], strides = [1, 1]} : vector<2x128xf32> to vector<2x32xf32>
    %116 = vector.extract_strided_slice %114 {offsets = [0, 32], sizes = [2, 32], strides = [1, 1]} : vector<2x128xf32> to vector<2x32xf32>
    %117 = vector.extract_strided_slice %114 {offsets = [0, 64], sizes = [2, 32], strides = [1, 1]} : vector<2x128xf32> to vector<2x32xf32>
    %118 = vector.extract_strided_slice %114 {offsets = [0, 96], sizes = [2, 32], strides = [1, 1]} : vector<2x128xf32> to vector<2x32xf32>
    %119 = arith.mulf %116, %80 : vector<2x32xf32>
    %120 = arith.mulf %115, %117 : vector<2x32xf32>
    %121 = arith.addf %119, %120 : vector<2x32xf32>
    %122 = math.tanh %121 : vector<2x32xf32>
    %123 = arith.mulf %118, %122 : vector<2x32xf32>
    %c3_i32 = arith.constant 3 : i32
    %124 = arith.index_cast %c3_i32 : i32 to index
    %c0_31 = arith.constant 0 : index
    %c0_32 = arith.constant 0 : index
    %125 = vector.load %arg9[%124, %c0_31, %c0_32] : memref<8x2x128xf32, #tpu.memory_space<vmem>>, vector<1x2x128xf32>
    %126 = vector.shape_cast %125 : vector<1x2x128xf32> to vector<2x128xf32>
    %cst_33 = arith.constant dense<0.000000e+00> : vector<2x128xf32>
    %127 = tpu.matmul %103, %0, %cst_33 {dimension_numbers = #tpu.dot_dimension_numbers<[1], [0], [0], [1], [0, 0, 1, 1], [], []>} : vector<2x32xf32>, vector<32x128xf32>, vector<2x128xf32> -> vector<2x128xf32>
    %128 = arith.addf %126, %127 : vector<2x128xf32>
    %129 = math.tanh %128 : vector<2x128xf32>
    %130 = arith.negf %128 : vector<2x128xf32>
    %131 = math.exp %130 : vector<2x128xf32>
    %cst_34 = arith.constant 1.000000e+00 : f32
    %132 = vector.broadcast %cst_34 : f32 to vector<2x128xf32>
    %133 = arith.addf %132, %131 : vector<2x128xf32>
    %134 = arith.divf %132, %133 : vector<2x128xf32>
    %135 = arith.select %20, %129, %134 : vector<2x128xi1>, vector<2x128xf32>
    %136 = vector.extract_strided_slice %135 {offsets = [0, 0], sizes = [2, 32], strides = [1, 1]} : vector<2x128xf32> to vector<2x32xf32>
    %137 = vector.extract_strided_slice %135 {offsets = [0, 32], sizes = [2, 32], strides = [1, 1]} : vector<2x128xf32> to vector<2x32xf32>
    %138 = vector.extract_strided_slice %135 {offsets = [0, 64], sizes = [2, 32], strides = [1, 1]} : vector<2x128xf32> to vector<2x32xf32>
    %139 = vector.extract_strided_slice %135 {offsets = [0, 96], sizes = [2, 32], strides = [1, 1]} : vector<2x128xf32> to vector<2x32xf32>
    %140 = arith.mulf %137, %101 : vector<2x32xf32>
    %141 = arith.mulf %136, %138 : vector<2x32xf32>
    %142 = arith.addf %140, %141 : vector<2x32xf32>
    %143 = math.tanh %142 : vector<2x32xf32>
    %144 = arith.mulf %139, %143 : vector<2x32xf32>
    %145 = tpu.concatenate %103, %123 in 1 : vector<2x32xf32>, vector<2x32xf32> -> vector<2x64xf32>
    %cst_35 = arith.constant dense<0.000000e+00> : vector<2x128xf32>
    %146 = tpu.matmul %145, %1, %cst_35 {dimension_numbers = #tpu.dot_dimension_numbers<[1], [0], [0], [1], [0, 0, 1, 1], [], []>} : vector<2x64xf32>, vector<64x128xf32>, vector<2x128xf32> -> vector<2x128xf32>
    %147 = vector.broadcast %2 : vector<1x128xf32> to vector<2x128xf32>
    %148 = arith.addf %146, %147 : vector<2x128xf32>
    %149 = math.tanh %148 : vector<2x128xf32>
    %150 = arith.negf %148 : vector<2x128xf32>
    %151 = math.exp %150 : vector<2x128xf32>
    %cst_36 = arith.constant 1.000000e+00 : f32
    %152 = vector.broadcast %cst_36 : f32 to vector<2x128xf32>
    %153 = arith.addf %152, %151 : vector<2x128xf32>
    %154 = arith.divf %152, %153 : vector<2x128xf32>
    %155 = arith.select %20, %149, %154 : vector<2x128xi1>, vector<2x128xf32>
    %156 = vector.extract_strided_slice %155 {offsets = [0, 0], sizes = [2, 32], strides = [1, 1]} : vector<2x128xf32> to vector<2x32xf32>
    %157 = vector.extract_strided_slice %155 {offsets = [0, 32], sizes = [2, 32], strides = [1, 1]} : vector<2x128xf32> to vector<2x32xf32>
    %158 = vector.extract_strided_slice %155 {offsets = [0, 64], sizes = [2, 32], strides = [1, 1]} : vector<2x128xf32> to vector<2x32xf32>
    %159 = vector.extract_strided_slice %155 {offsets = [0, 96], sizes = [2, 32], strides = [1, 1]} : vector<2x128xf32> to vector<2x32xf32>
    %160 = arith.mulf %157, %121 : vector<2x32xf32>
    %161 = arith.mulf %156, %158 : vector<2x32xf32>
    %162 = arith.addf %160, %161 : vector<2x32xf32>
    %163 = math.tanh %162 : vector<2x32xf32>
    %164 = arith.mulf %159, %163 : vector<2x32xf32>
    %c4_i32 = arith.constant 4 : i32
    %165 = arith.index_cast %c4_i32 : i32 to index
    %c0_37 = arith.constant 0 : index
    %c0_38 = arith.constant 0 : index
    %166 = vector.load %arg9[%165, %c0_37, %c0_38] : memref<8x2x128xf32, #tpu.memory_space<vmem>>, vector<1x2x128xf32>
    %167 = vector.shape_cast %166 : vector<1x2x128xf32> to vector<2x128xf32>
    %cst_39 = arith.constant dense<0.000000e+00> : vector<2x128xf32>
    %168 = tpu.matmul %144, %0, %cst_39 {dimension_numbers = #tpu.dot_dimension_numbers<[1], [0], [0], [1], [0, 0, 1, 1], [], []>} : vector<2x32xf32>, vector<32x128xf32>, vector<2x128xf32> -> vector<2x128xf32>
    %169 = arith.addf %167, %168 : vector<2x128xf32>
    %170 = math.tanh %169 : vector<2x128xf32>
    %171 = arith.negf %169 : vector<2x128xf32>
    %172 = math.exp %171 : vector<2x128xf32>
    %cst_40 = arith.constant 1.000000e+00 : f32
    %173 = vector.broadcast %cst_40 : f32 to vector<2x128xf32>
    %174 = arith.addf %173, %172 : vector<2x128xf32>
    %175 = arith.divf %173, %174 : vector<2x128xf32>
    %176 = arith.select %20, %170, %175 : vector<2x128xi1>, vector<2x128xf32>
    %177 = vector.extract_strided_slice %176 {offsets = [0, 0], sizes = [2, 32], strides = [1, 1]} : vector<2x128xf32> to vector<2x32xf32>
    %178 = vector.extract_strided_slice %176 {offsets = [0, 32], sizes = [2, 32], strides = [1, 1]} : vector<2x128xf32> to vector<2x32xf32>
    %179 = vector.extract_strided_slice %176 {offsets = [0, 64], sizes = [2, 32], strides = [1, 1]} : vector<2x128xf32> to vector<2x32xf32>
    %180 = vector.extract_strided_slice %176 {offsets = [0, 96], sizes = [2, 32], strides = [1, 1]} : vector<2x128xf32> to vector<2x32xf32>
    %181 = arith.mulf %178, %142 : vector<2x32xf32>
    %182 = arith.mulf %177, %179 : vector<2x32xf32>
    %183 = arith.addf %181, %182 : vector<2x32xf32>
    %184 = math.tanh %183 : vector<2x32xf32>
    %185 = arith.mulf %180, %184 : vector<2x32xf32>
    %186 = tpu.concatenate %144, %164 in 1 : vector<2x32xf32>, vector<2x32xf32> -> vector<2x64xf32>
    %cst_41 = arith.constant dense<0.000000e+00> : vector<2x128xf32>
    %187 = tpu.matmul %186, %1, %cst_41 {dimension_numbers = #tpu.dot_dimension_numbers<[1], [0], [0], [1], [0, 0, 1, 1], [], []>} : vector<2x64xf32>, vector<64x128xf32>, vector<2x128xf32> -> vector<2x128xf32>
    %188 = vector.broadcast %2 : vector<1x128xf32> to vector<2x128xf32>
    %189 = arith.addf %187, %188 : vector<2x128xf32>
    %190 = math.tanh %189 : vector<2x128xf32>
    %191 = arith.negf %189 : vector<2x128xf32>
    %192 = math.exp %191 : vector<2x128xf32>
    %cst_42 = arith.constant 1.000000e+00 : f32
    %193 = vector.broadcast %cst_42 : f32 to vector<2x128xf32>
    %194 = arith.addf %193, %192 : vector<2x128xf32>
    %195 = arith.divf %193, %194 : vector<2x128xf32>
    %196 = arith.select %20, %190, %195 : vector<2x128xi1>, vector<2x128xf32>
    %197 = vector.extract_strided_slice %196 {offsets = [0, 0], sizes = [2, 32], strides = [1, 1]} : vector<2x128xf32> to vector<2x32xf32>
    %198 = vector.extract_strided_slice %196 {offsets = [0, 32], sizes = [2, 32], strides = [1, 1]} : vector<2x128xf32> to vector<2x32xf32>
    %199 = vector.extract_strided_slice %196 {offsets = [0, 64], sizes = [2, 32], strides = [1, 1]} : vector<2x128xf32> to vector<2x32xf32>
    %200 = vector.extract_strided_slice %196 {offsets = [0, 96], sizes = [2, 32], strides = [1, 1]} : vector<2x128xf32> to vector<2x32xf32>
    %201 = arith.mulf %198, %162 : vector<2x32xf32>
    %202 = arith.mulf %197, %199 : vector<2x32xf32>
    %203 = arith.addf %201, %202 : vector<2x32xf32>
    %204 = math.tanh %203 : vector<2x32xf32>
    %205 = arith.mulf %200, %204 : vector<2x32xf32>
    %c5_i32 = arith.constant 5 : i32
    %206 = arith.index_cast %c5_i32 : i32 to index
    %c0_43 = arith.constant 0 : index
    %c0_44 = arith.constant 0 : index
    %207 = vector.load %arg9[%206, %c0_43, %c0_44] : memref<8x2x128xf32, #tpu.memory_space<vmem>>, vector<1x2x128xf32>
    %208 = vector.shape_cast %207 : vector<1x2x128xf32> to vector<2x128xf32>
    %cst_45 = arith.constant dense<0.000000e+00> : vector<2x128xf32>
    %209 = tpu.matmul %185, %0, %cst_45 {dimension_numbers = #tpu.dot_dimension_numbers<[1], [0], [0], [1], [0, 0, 1, 1], [], []>} : vector<2x32xf32>, vector<32x128xf32>, vector<2x128xf32> -> vector<2x128xf32>
    %210 = arith.addf %208, %209 : vector<2x128xf32>
    %211 = math.tanh %210 : vector<2x128xf32>
    %212 = arith.negf %210 : vector<2x128xf32>
    %213 = math.exp %212 : vector<2x128xf32>
    %cst_46 = arith.constant 1.000000e+00 : f32
    %214 = vector.broadcast %cst_46 : f32 to vector<2x128xf32>
    %215 = arith.addf %214, %213 : vector<2x128xf32>
    %216 = arith.divf %214, %215 : vector<2x128xf32>
    %217 = arith.select %20, %211, %216 : vector<2x128xi1>, vector<2x128xf32>
    %218 = vector.extract_strided_slice %217 {offsets = [0, 0], sizes = [2, 32], strides = [1, 1]} : vector<2x128xf32> to vector<2x32xf32>
    %219 = vector.extract_strided_slice %217 {offsets = [0, 32], sizes = [2, 32], strides = [1, 1]} : vector<2x128xf32> to vector<2x32xf32>
    %220 = vector.extract_strided_slice %217 {offsets = [0, 64], sizes = [2, 32], strides = [1, 1]} : vector<2x128xf32> to vector<2x32xf32>
    %221 = vector.extract_strided_slice %217 {offsets = [0, 96], sizes = [2, 32], strides = [1, 1]} : vector<2x128xf32> to vector<2x32xf32>
    %222 = arith.mulf %219, %183 : vector<2x32xf32>
    %223 = arith.mulf %218, %220 : vector<2x32xf32>
    %224 = arith.addf %222, %223 : vector<2x32xf32>
    %225 = math.tanh %224 : vector<2x32xf32>
    %226 = arith.mulf %221, %225 : vector<2x32xf32>
    %227 = tpu.concatenate %185, %205 in 1 : vector<2x32xf32>, vector<2x32xf32> -> vector<2x64xf32>
    %cst_47 = arith.constant dense<0.000000e+00> : vector<2x128xf32>
    %228 = tpu.matmul %227, %1, %cst_47 {dimension_numbers = #tpu.dot_dimension_numbers<[1], [0], [0], [1], [0, 0, 1, 1], [], []>} : vector<2x64xf32>, vector<64x128xf32>, vector<2x128xf32> -> vector<2x128xf32>
    %229 = vector.broadcast %2 : vector<1x128xf32> to vector<2x128xf32>
    %230 = arith.addf %228, %229 : vector<2x128xf32>
    %231 = math.tanh %230 : vector<2x128xf32>
    %232 = arith.negf %230 : vector<2x128xf32>
    %233 = math.exp %232 : vector<2x128xf32>
    %cst_48 = arith.constant 1.000000e+00 : f32
    %234 = vector.broadcast %cst_48 : f32 to vector<2x128xf32>
    %235 = arith.addf %234, %233 : vector<2x128xf32>
    %236 = arith.divf %234, %235 : vector<2x128xf32>
    %237 = arith.select %20, %231, %236 : vector<2x128xi1>, vector<2x128xf32>
    %238 = vector.extract_strided_slice %237 {offsets = [0, 0], sizes = [2, 32], strides = [1, 1]} : vector<2x128xf32> to vector<2x32xf32>
    %239 = vector.extract_strided_slice %237 {offsets = [0, 32], sizes = [2, 32], strides = [1, 1]} : vector<2x128xf32> to vector<2x32xf32>
    %240 = vector.extract_strided_slice %237 {offsets = [0, 64], sizes = [2, 32], strides = [1, 1]} : vector<2x128xf32> to vector<2x32xf32>
    %241 = vector.extract_strided_slice %237 {offsets = [0, 96], sizes = [2, 32], strides = [1, 1]} : vector<2x128xf32> to vector<2x32xf32>
    %242 = arith.mulf %239, %203 : vector<2x32xf32>
    %243 = arith.mulf %238, %240 : vector<2x32xf32>
    %244 = arith.addf %242, %243 : vector<2x32xf32>
    %245 = math.tanh %244 : vector<2x32xf32>
    %246 = arith.mulf %241, %245 : vector<2x32xf32>
    %c6_i32 = arith.constant 6 : i32
    %247 = arith.index_cast %c6_i32 : i32 to index
    %c0_49 = arith.constant 0 : index
    %c0_50 = arith.constant 0 : index
    %248 = vector.load %arg9[%247, %c0_49, %c0_50] : memref<8x2x128xf32, #tpu.memory_space<vmem>>, vector<1x2x128xf32>
    %249 = vector.shape_cast %248 : vector<1x2x128xf32> to vector<2x128xf32>
    %cst_51 = arith.constant dense<0.000000e+00> : vector<2x128xf32>
    %250 = tpu.matmul %226, %0, %cst_51 {dimension_numbers = #tpu.dot_dimension_numbers<[1], [0], [0], [1], [0, 0, 1, 1], [], []>} : vector<2x32xf32>, vector<32x128xf32>, vector<2x128xf32> -> vector<2x128xf32>
    %251 = arith.addf %249, %250 : vector<2x128xf32>
    %252 = math.tanh %251 : vector<2x128xf32>
    %253 = arith.negf %251 : vector<2x128xf32>
    %254 = math.exp %253 : vector<2x128xf32>
    %cst_52 = arith.constant 1.000000e+00 : f32
    %255 = vector.broadcast %cst_52 : f32 to vector<2x128xf32>
    %256 = arith.addf %255, %254 : vector<2x128xf32>
    %257 = arith.divf %255, %256 : vector<2x128xf32>
    %258 = arith.select %20, %252, %257 : vector<2x128xi1>, vector<2x128xf32>
    %259 = vector.extract_strided_slice %258 {offsets = [0, 0], sizes = [2, 32], strides = [1, 1]} : vector<2x128xf32> to vector<2x32xf32>
    %260 = vector.extract_strided_slice %258 {offsets = [0, 32], sizes = [2, 32], strides = [1, 1]} : vector<2x128xf32> to vector<2x32xf32>
    %261 = vector.extract_strided_slice %258 {offsets = [0, 64], sizes = [2, 32], strides = [1, 1]} : vector<2x128xf32> to vector<2x32xf32>
    %262 = vector.extract_strided_slice %258 {offsets = [0, 96], sizes = [2, 32], strides = [1, 1]} : vector<2x128xf32> to vector<2x32xf32>
    %263 = arith.mulf %260, %224 : vector<2x32xf32>
    %264 = arith.mulf %259, %261 : vector<2x32xf32>
    %265 = arith.addf %263, %264 : vector<2x32xf32>
    %266 = math.tanh %265 : vector<2x32xf32>
    %267 = arith.mulf %262, %266 : vector<2x32xf32>
    %268 = tpu.concatenate %226, %246 in 1 : vector<2x32xf32>, vector<2x32xf32> -> vector<2x64xf32>
    %cst_53 = arith.constant dense<0.000000e+00> : vector<2x128xf32>
    %269 = tpu.matmul %268, %1, %cst_53 {dimension_numbers = #tpu.dot_dimension_numbers<[1], [0], [0], [1], [0, 0, 1, 1], [], []>} : vector<2x64xf32>, vector<64x128xf32>, vector<2x128xf32> -> vector<2x128xf32>
    %270 = vector.broadcast %2 : vector<1x128xf32> to vector<2x128xf32>
    %271 = arith.addf %269, %270 : vector<2x128xf32>
    %272 = math.tanh %271 : vector<2x128xf32>
    %273 = arith.negf %271 : vector<2x128xf32>
    %274 = math.exp %273 : vector<2x128xf32>
    %cst_54 = arith.constant 1.000000e+00 : f32
    %275 = vector.broadcast %cst_54 : f32 to vector<2x128xf32>
    %276 = arith.addf %275, %274 : vector<2x128xf32>
    %277 = arith.divf %275, %276 : vector<2x128xf32>
    %278 = arith.select %20, %272, %277 : vector<2x128xi1>, vector<2x128xf32>
    %279 = vector.extract_strided_slice %278 {offsets = [0, 0], sizes = [2, 32], strides = [1, 1]} : vector<2x128xf32> to vector<2x32xf32>
    %280 = vector.extract_strided_slice %278 {offsets = [0, 32], sizes = [2, 32], strides = [1, 1]} : vector<2x128xf32> to vector<2x32xf32>
    %281 = vector.extract_strided_slice %278 {offsets = [0, 64], sizes = [2, 32], strides = [1, 1]} : vector<2x128xf32> to vector<2x32xf32>
    %282 = vector.extract_strided_slice %278 {offsets = [0, 96], sizes = [2, 32], strides = [1, 1]} : vector<2x128xf32> to vector<2x32xf32>
    %283 = arith.mulf %280, %244 : vector<2x32xf32>
    %284 = arith.mulf %279, %281 : vector<2x32xf32>
    %285 = arith.addf %283, %284 : vector<2x32xf32>
    %286 = math.tanh %285 : vector<2x32xf32>
    %287 = arith.mulf %282, %286 : vector<2x32xf32>
    %c7_i32 = arith.constant 7 : i32
    %288 = arith.index_cast %c7_i32 : i32 to index
    %c0_55 = arith.constant 0 : index
    %c0_56 = arith.constant 0 : index
    %289 = vector.load %arg9[%288, %c0_55, %c0_56] : memref<8x2x128xf32, #tpu.memory_space<vmem>>, vector<1x2x128xf32>
    %290 = vector.shape_cast %289 : vector<1x2x128xf32> to vector<2x128xf32>
    %cst_57 = arith.constant dense<0.000000e+00> : vector<2x128xf32>
    %291 = tpu.matmul %267, %0, %cst_57 {dimension_numbers = #tpu.dot_dimension_numbers<[1], [0], [0], [1], [0, 0, 1, 1], [], []>} : vector<2x32xf32>, vector<32x128xf32>, vector<2x128xf32> -> vector<2x128xf32>
    %292 = arith.addf %290, %291 : vector<2x128xf32>
    %293 = math.tanh %292 : vector<2x128xf32>
    %294 = arith.negf %292 : vector<2x128xf32>
    %295 = math.exp %294 : vector<2x128xf32>
    %cst_58 = arith.constant 1.000000e+00 : f32
    %296 = vector.broadcast %cst_58 : f32 to vector<2x128xf32>
    %297 = arith.addf %296, %295 : vector<2x128xf32>
    %298 = arith.divf %296, %297 : vector<2x128xf32>
    %299 = arith.select %20, %293, %298 : vector<2x128xi1>, vector<2x128xf32>
    %300 = vector.extract_strided_slice %299 {offsets = [0, 0], sizes = [2, 32], strides = [1, 1]} : vector<2x128xf32> to vector<2x32xf32>
    %301 = vector.extract_strided_slice %299 {offsets = [0, 32], sizes = [2, 32], strides = [1, 1]} : vector<2x128xf32> to vector<2x32xf32>
    %302 = vector.extract_strided_slice %299 {offsets = [0, 64], sizes = [2, 32], strides = [1, 1]} : vector<2x128xf32> to vector<2x32xf32>
    %303 = vector.extract_strided_slice %299 {offsets = [0, 96], sizes = [2, 32], strides = [1, 1]} : vector<2x128xf32> to vector<2x32xf32>
    %304 = arith.mulf %301, %265 : vector<2x32xf32>
    %305 = arith.mulf %300, %302 : vector<2x32xf32>
    %306 = arith.addf %304, %305 : vector<2x32xf32>
    %307 = math.tanh %306 : vector<2x32xf32>
    %308 = arith.mulf %303, %307 : vector<2x32xf32>
    %309 = tpu.concatenate %267, %287 in 1 : vector<2x32xf32>, vector<2x32xf32> -> vector<2x64xf32>
    %cst_59 = arith.constant dense<0.000000e+00> : vector<2x128xf32>
    %310 = tpu.matmul %309, %1, %cst_59 {dimension_numbers = #tpu.dot_dimension_numbers<[1], [0], [0], [1], [0, 0, 1, 1], [], []>} : vector<2x64xf32>, vector<64x128xf32>, vector<2x128xf32> -> vector<2x128xf32>
    %311 = vector.broadcast %2 : vector<1x128xf32> to vector<2x128xf32>
    %312 = arith.addf %310, %311 : vector<2x128xf32>
    %313 = math.tanh %312 : vector<2x128xf32>
    %314 = arith.negf %312 : vector<2x128xf32>
    %315 = math.exp %314 : vector<2x128xf32>
    %cst_60 = arith.constant 1.000000e+00 : f32
    %316 = vector.broadcast %cst_60 : f32 to vector<2x128xf32>
    %317 = arith.addf %316, %315 : vector<2x128xf32>
    %318 = arith.divf %316, %317 : vector<2x128xf32>
    %319 = arith.select %20, %313, %318 : vector<2x128xi1>, vector<2x128xf32>
    %320 = vector.extract_strided_slice %319 {offsets = [0, 0], sizes = [2, 32], strides = [1, 1]} : vector<2x128xf32> to vector<2x32xf32>
    %321 = vector.extract_strided_slice %319 {offsets = [0, 32], sizes = [2, 32], strides = [1, 1]} : vector<2x128xf32> to vector<2x32xf32>
    %322 = vector.extract_strided_slice %319 {offsets = [0, 64], sizes = [2, 32], strides = [1, 1]} : vector<2x128xf32> to vector<2x32xf32>
    %323 = vector.extract_strided_slice %319 {offsets = [0, 96], sizes = [2, 32], strides = [1, 1]} : vector<2x128xf32> to vector<2x32xf32>
    %324 = arith.mulf %321, %285 : vector<2x32xf32>
    %325 = arith.mulf %320, %322 : vector<2x32xf32>
    %326 = arith.addf %324, %325 : vector<2x32xf32>
    %327 = math.tanh %326 : vector<2x32xf32>
    %328 = arith.mulf %323, %327 : vector<2x32xf32>
    %c7_i32_61 = arith.constant 7 : i32
    %329 = tpu.concatenate %308, %328 in 1 : vector<2x32xf32>, vector<2x32xf32> -> vector<2x64xf32>
    %cst_62 = arith.constant dense<0.000000e+00> : vector<2x128xf32>
    %330 = tpu.matmul %329, %1, %cst_62 {dimension_numbers = #tpu.dot_dimension_numbers<[1], [0], [0], [1], [0, 0, 1, 1], [], []>} : vector<2x64xf32>, vector<64x128xf32>, vector<2x128xf32> -> vector<2x128xf32>
    %331 = vector.broadcast %2 : vector<1x128xf32> to vector<2x128xf32>
    %332 = arith.addf %330, %331 : vector<2x128xf32>
    %333 = math.tanh %332 : vector<2x128xf32>
    %334 = arith.negf %332 : vector<2x128xf32>
    %335 = math.exp %334 : vector<2x128xf32>
    %cst_63 = arith.constant 1.000000e+00 : f32
    %336 = vector.broadcast %cst_63 : f32 to vector<2x128xf32>
    %337 = arith.addf %336, %335 : vector<2x128xf32>
    %338 = arith.divf %336, %337 : vector<2x128xf32>
    %339 = arith.select %20, %333, %338 : vector<2x128xi1>, vector<2x128xf32>
    %340 = vector.extract_strided_slice %339 {offsets = [0, 0], sizes = [2, 32], strides = [1, 1]} : vector<2x128xf32> to vector<2x32xf32>
    %341 = vector.extract_strided_slice %339 {offsets = [0, 32], sizes = [2, 32], strides = [1, 1]} : vector<2x128xf32> to vector<2x32xf32>
    %342 = vector.extract_strided_slice %339 {offsets = [0, 64], sizes = [2, 32], strides = [1, 1]} : vector<2x128xf32> to vector<2x32xf32>
    %343 = vector.extract_strided_slice %339 {offsets = [0, 96], sizes = [2, 32], strides = [1, 1]} : vector<2x128xf32> to vector<2x32xf32>
    %344 = arith.mulf %341, %326 : vector<2x32xf32>
    %345 = arith.mulf %340, %342 : vector<2x32xf32>
    %346 = arith.addf %344, %345 : vector<2x32xf32>
    %347 = math.tanh %346 : vector<2x32xf32>
    %348 = arith.mulf %343, %347 : vector<2x32xf32>
    %c0_64 = arith.constant 0 : index
    %c0_65 = arith.constant 0 : index
    %349 = vector.load %arg6[%c0_64, %c0_65] : memref<32x1xf32, #tpu.memory_space<vmem>>, vector<32x1xf32>
    %cst_66 = arith.constant dense<0.000000e+00> : vector<2x1xf32>
    %350 = tpu.matmul %348, %349, %cst_66 {dimension_numbers = #tpu.dot_dimension_numbers<[1], [0], [0], [1], [0, 0, 1, 1], [], []>} : vector<2x32xf32>, vector<32x1xf32>, vector<2x1xf32> -> vector<2x1xf32>
    %c0_67 = arith.constant 0 : index
    %c0_68 = arith.constant 0 : index
    %351 = vector.load %arg7[%c0_67, %c0_68] : memref<1x1xf32, #tpu.memory_space<vmem>>, vector<1x1xf32>
    %352 = vector.broadcast %351 : vector<1x1xf32> to vector<2x1xf32>
    %353 = arith.addf %350, %352 : vector<2x1xf32>
    %c0_69 = arith.constant 0 : index
    %c0_70 = arith.constant 0 : index
    %354 = vector.load %arg8[%c0_69, %c0_70] : memref<2x1xf32, #tpu.memory_space<vmem>>, vector<2x1xf32>
    tpu.vector_store %arg8[%c0_69, %c0_70], %353 {strides = array<i32>} : memref<2x1xf32, #tpu.memory_space<vmem>>, vector<2x1xf32>,
    return
  }
}

</mosaic_0001>

<llo_original>
// kernel: tpu_custom_call.1
$region0: #{tpu_custom_call.1}
  #allocation0 [shape = 'u32[]', space=smem, size = 0x4, offset = 0x4, fixed_abs, tag = 'smem constant byte address 0x4 - core index']
  #allocation1 [shape = 'u32[72,128]{1,0:T(1,128)}', space=vmem, size = 0x9000, scoped, tag = 'internal scratch']
  #allocation2 [shape = 'f32[8,2,128]{2,1,0:T(2,128)}', space=vmem, size = 0x2000, scoped, tag = 'scratch operand']
  #allocation3 [shape = 'f32[1,1]{1,0:T(1,128)S(1)}', space=vmem, size = 0x200, scoped, tag = 'scoped memory for tpu_custom_call.1']
  %s0 = inlined_call_operand.vmem [shape: f32[8,2], index: 0, kind: input, shape index: {}]
  %s1 = inlined_call_operand.vmem [shape: f32[1,128], index: 1, kind: input, shape index: {}]
  %s2 = inlined_call_operand.vmem [shape: f32[32,128], index: 2, kind: input, shape index: {}]
  %s3 = inlined_call_operand.vmem [shape: f32[1,128], index: 3, kind: input, shape index: {}]
  %s4 = inlined_call_operand.hbm [shape: f32[64,128], index: 4, kind: input, shape index: {}]
  %s5 = inlined_call_operand.vmem [shape: f32[1,128], index: 5, kind: input, shape index: {}]
  %s6 = inlined_call_operand.vmem [shape: f32[32,1], index: 6, kind: input, shape index: {}]
  %s7 = inlined_call_operand.<no memory space> [shape: f32[1,1], index: 7, kind: input, shape index: {}]
  %s8 = inlined_call_operand.vmem [shape: f32[2,1], index: 8, kind: output, shape index: {}]
  %s9 = sld [smem:[#allocation0]]
  $region46: #{tpu_custom_call.1} parent=0
    _
  %s11 = ssub.s32 1, %s9
  %s12 = scalar_select 0, %s11, %s9
  %v13 = vstv %s7
  %14 = vst [vmem:[#allocation3] sm:$0x1] %v13
  $region1: #{tpu_custom_call.1} parent=0
    #allocation4 [shape = 'u8[32768]{0}', space=vmem, size = 0x8000, scoped, tag = 'input window, operand 4, single buffered']
    #allocation5 [shape = 's32[1]{0}', space=sflag, size = 0x4, scoped, tag = 'scoped memory for tpu_custom_call.1']
    %15 = vsyncpa [#allocation5], 0
    // Predicated region
    $region2: #{tpu_custom_call.1} parent=1 // pred_check
      _
    $region3: #{tpu_custom_call.1} parent=1 // pred_check_branch
      %17 = sbr.rel (0) target = $region5
    $region4: #{tpu_custom_call.1} parent=1 // pred_region
      _
    $region5: #{tpu_custom_call.1} parent=1 // pred_fallthru
      _
    // Predicated region
    $region6: #{tpu_custom_call.1} parent=1 // pred_check
      _
    $region7: #{tpu_custom_call.1} parent=1 // pred_check_branch
      %19 = sbr.rel (0) target = $region9
    $region8: #{tpu_custom_call.1} parent=1 // pred_region
      _
    $region9: #{tpu_custom_call.1} parent=1 // pred_fallthru
      _
    // Predicated region
    $region10: #{tpu_custom_call.1} parent=1 // pred_check
      _
    $region11: #{tpu_custom_call.1} parent=1 // pred_check_branch
      %21 = sbr.rel (0) target = $region13
    $region12: #{tpu_custom_call.1} parent=1 // pred_region
      _
    $region13: #{tpu_custom_call.1} parent=1 // pred_fallthru
      _
    // Predicated region
    $region14: #{tpu_custom_call.1} parent=1 // pred_check
      _
    $region15: #{tpu_custom_call.1} parent=1 // pred_check_branch
      %23 = sbr.rel (0) target = $region17
    $region16: #{tpu_custom_call.1} parent=1 // pred_region
      _
    $region17: #{tpu_custom_call.1} parent=1 // pred_fallthru
      _
    // Predicated region
    $region18: #{tpu_custom_call.1} parent=1 // pred_check
      _
    $region19: #{tpu_custom_call.1} parent=1 // pred_check_branch
      %25 = sbr.rel (0) target = $region21
    $region20: #{tpu_custom_call.1} parent=1 // pred_region
      %27 = vsyncadd [#allocation5], 0
      %s28 = sshll.u32 %s4, 4
      %s29 = int_to_ptr.hbm [resolvable:$true] %s28
      %s30 = sshll.u32 [#allocation4], 4
      %s31 = int_to_ptr.vmem [resolvable:$true] %s30
      %36 = dma.hbm_to_vmem [thread:$0]  %s29, 1024, %s31, [#allocation5], 128, 128, 8
    $region21: #{tpu_custom_call.1} parent=1 // pred_fallthru
      _
    // Predicated region
    $region22: #{tpu_custom_call.1} parent=1 // pred_check
      _
    $region23: #{tpu_custom_call.1} parent=1 // pred_check_branch
      %38 = sbr.rel (0) target = $region25
    $region24: #{tpu_custom_call.1} parent=1 // pred_region
      _
    $region25: #{tpu_custom_call.1} parent=1 // pred_fallthru
      _
    // Predicated region
    $region26: #{tpu_custom_call.1} parent=1 // pred_check
      _
    $region27: #{tpu_custom_call.1} parent=1 // pred_check_branch
      %40 = sbr.rel (0) target = $region29
    $region28: #{tpu_custom_call.1} parent=1 // pred_region
      _
    $region29: #{tpu_custom_call.1} parent=1 // pred_fallthru
      _
    // Predicated region
    $region30: #{tpu_custom_call.1} parent=1 // pred_check
      _
    $region31: #{tpu_custom_call.1} parent=1 // pred_check_branch
      %42 = sbr.rel (0) target = $region33
    $region32: #{tpu_custom_call.1} parent=1 // pred_region
      _
    $region33: #{tpu_custom_call.1} parent=1 // pred_fallthru
      _
    // Predicated region
    $region34: #{tpu_custom_call.1} parent=1 // pred_check
      _
    $region35: #{tpu_custom_call.1} parent=1 // pred_check_branch
      %44 = sbr.rel (0) target = $region37
    $region36: #{tpu_custom_call.1} parent=1 // pred_region
      %46 = dma.done [#allocation5], 1024
    $region37: #{tpu_custom_call.1} parent=1 // pred_fallthru
      _
    %v47 = vld [vmem:[%s2] sm:$0xff]
    %v48 = vld [vmem:[%s2 + $0x8] sm:$0xff]
    %v49 = vld [vmem:[%s2 + $0x10] sm:$0xff]
    %v50 = vld [vmem:[%s2 + $0x18] sm:$0xff]
    %v51 = vld [vmem:[#allocation4] sm:$0xff]
    %v52 = vld [vmem:[#allocation4 + $0x8] sm:$0xff]
    %v53 = vld [vmem:[#allocation4 + $0x10] sm:$0xff]
    %v54 = vld [vmem:[#allocation4 + $0x18] sm:$0xff]
    %v55 = vld [vmem:[#allocation4 + $0x20] sm:$0xff]
    %v56 = vld [vmem:[#allocation4 + $0x28] sm:$0xff]
    %v57 = vld [vmem:[#allocation4 + $0x30] sm:$0xff]
    %v58 = vld [vmem:[#allocation4 + $0x38] sm:$0xff]
    %v59 = vld [vmem:[%s5] sm:$0x1]
    %v60 = vld [vmem:[%s0] sm:$0xff]
    %v61 = vperm.slane %v60, 0
    %v62 = vlaneseq
    %v63 = vshrl.u32 %v62, 7
    %65 = vset.pattern.permute.xlu0 %v63
    %66 = vperm.xlu0 %65, %v61
    %v67 = vpop.permute.xlu0 %66
    %v68 = vperm.slane %v60, 1
    %v69 = vlaneseq
    %v70 = vshrl.u32 %v69, 7
    %72 = vset.pattern.permute.xlu0 %v70
    %73 = vperm.xlu0 %72, %v68
    %v74 = vpop.permute.xlu0 %73
    %v75 = vperm.slane %v60, 2
    %v76 = vlaneseq
    %v77 = vshrl.u32 %v76, 7
    %79 = vset.pattern.permute.xlu0 %v77
    %80 = vperm.xlu0 %79, %v75
    %v81 = vpop.permute.xlu0 %80
    %v82 = vperm.slane %v60, 3
    %v83 = vlaneseq
    %v84 = vshrl.u32 %v83, 7
    %86 = vset.pattern.permute.xlu0 %v84
    %87 = vperm.xlu0 %86, %v82
    %v88 = vpop.permute.xlu0 %87
    %v89 = vperm.slane %v60, 4
    %v90 = vlaneseq
    %v91 = vshrl.u32 %v90, 7
    %93 = vset.pattern.permute.xlu0 %v91
    %94 = vperm.xlu0 %93, %v89
    %v95 = vpop.permute.xlu0 %94
    %v96 = vperm.slane %v60, 5
    %v97 = vlaneseq
    %v98 = vshrl.u32 %v97, 7
    %100 = vset.pattern.permute.xlu0 %v98
    %101 = vperm.xlu0 %100, %v96
    %v102 = vpop.permute.xlu0 %101
    %v103 = vperm.slane %v60, 6
    %v104 = vlaneseq
    %v105 = vshrl.u32 %v104, 7
    %107 = vset.pattern.permute.xlu0 %v105
    %108 = vperm.xlu0 %107, %v103
    %v109 = vpop.permute.xlu0 %108
    %v110 = vperm.slane %v60, 7
    %v111 = vlaneseq
    %v112 = vshrl.u32 %v111, 7
    %114 = vset.pattern.permute.xlu0 %v112
    %115 = vperm.xlu0 %114, %v110
    %v116 = vpop.permute.xlu0 %115
    %v117 = vld [vmem:[%s1] sm:$0x1]
    %v119 = vperm.slane %v117, 0
    %v121 = vmul.f32 %v67, %v119
    %v122 = vmul.f32 %v74, %v119
    %v123 = vmul.f32 %v81, %v119
    %v124 = vmul.f32 %v88, %v119
    %v125 = vmul.f32 %v95, %v119
    %v126 = vmul.f32 %v102, %v119
    %v127 = vmul.f32 %v109, %v119
    %v128 = vmul.f32 %v116, %v119
    %v129 = vld [vmem:[%s3] sm:$0x1]
    %v131 = vperm.slane %v129, 0
    %v133 = vadd.f32 %v121, %v131
    %v134 = vadd.f32 %v122, %v131
    %v135 = vadd.f32 %v123, %v131
    %v136 = vadd.f32 %v124, %v131
    %v137 = vadd.f32 %v125, %v131
    %v138 = vadd.f32 %v126, %v131
    %v139 = vadd.f32 %v127, %v131
    %v140 = vadd.f32 %v128, %v131
    %141 = vst [vmem:[#allocation2] sm:$0x3] %v133
    %142 = vst [vmem:[#allocation2 + $0x2] sm:$0x3] %v134
    %143 = vst [vmem:[#allocation2 + $0x4] sm:$0x3] %v135
    %144 = vst [vmem:[#allocation2 + $0x6] sm:$0x3] %v136
    %145 = vst [vmem:[#allocation2 + $0x8] sm:$0x3] %v137
    %146 = vst [vmem:[#allocation2 + $0xa] sm:$0x3] %v138
    %147 = vst [vmem:[#allocation2 + $0xc] sm:$0x3] %v139
    %148 = vst [vmem:[#allocation2 + $0xe] sm:$0x3] %v140
    %v149 = vlaneseq
    %v150 = vand.u32 %v149, 127
    %vm151 = vcmp.ge.s32.totalorder %v150, 64
    %vm152 = vcmp.lt.s32.totalorder %v150, 96
    %vm153 = vmand %vm151, %vm152
    %v154 = vld [vmem:[#allocation2] sm:$0x3]
    %vm155 = vcmask 261120
    %v157 = vsel %vm155, 0.0, 0
    %159 = vmatpush.msra.mxu0 0.0
    %160 = vmatpush.msra.mxu0 0.0
    %161 = vmatpush.msra.mxu0 0.0
    %162 = vmatpush.msra.mxu0 0.0
    %163 = vmatpush.msra.mxu0 0.0
    %164 = vmatpush.msra.mxu0 0.0
    %165 = vmatpush.msra.mxu0 0.0
    %166 = vmatpush.msra.mxu0 0.0
    %167 = vmatpush.msra.mxu0 0.0
    %168 = vmatpush.msra.mxu0 0.0
    %169 = vmatpush.msra.mxu0 0.0
    %170 = vmatpush.msra.mxu0 0.0
    %171 = vmatpush.msra.mxu0 %v50
    %172 = vmatpush.msra.mxu0 %v49
    %173 = vmatpush.msra.mxu0 %v48
    %174 = vmatpush.msra.mxu0 %v47
    %175 = vmatmul.f32.gmra.mxu0 %v157
    %v176 = vpop.f32.mrf.mxu0
    %v177 = vadd.f32 0.0, %v176
    %178 = vdwg.mxu0
    %v179 = vadd.f32 %v154, %v177
    %v180 = vtanh.pop %v179
    %v181 = vxor.u32 %v179, 2147483648
    %v182 = vmul.f32 %v181, 1.442695
    %v183 = vpow.pop %v182
    %v184 = vadd.f32 %v183, 1.0
    %v185 = vrcp.pop %v184
    %v186 = vmul.f32 %v184, %v185
    %v187 = vsub.f32 1.0, %v186
    %v188 = vmul.f32 %v185, %v187
    %v189 = vadd.f32 %v185, %v188
    %vm190 = vweird.f32 %v184
    %vm191 = vweird.f32 %v185
    %vm192 = vmor %vm190, %vm191
    %v193 = vsel %vm192, %v185, %v189
    %v194 = vand.u32 2147483647, %v184
    %vm195 = vcmp.eq.f32.partialorder %v194, 8.507059e+37
    %v196 = vand.u32 %v184, 2147483648
    %v197 = vor.u32 1.1754944e-38, %v196
    %v198 = vsel %vm195, %v197, %v193
    %v199 = vmul.f32 1.0, %v198
    %v200 = vsel %vm153, %v180, %v199
    %v201 = vmul.f32 %v200, 0.0
    %203 = vrot.lane.b32.xlu0 %v200, 64
    %v204 = vpop.permute.xlu0 %203
    %v206 = vmul.f32 %v200, %v204
    %208 = vrot.lane.b32.xlu0 %v206, 32
    %v209 = vpop.permute.xlu0 %208
    %v211 = vadd.f32 %v201, %v209
    %v212 = vtanh.pop %v211
    %214 = vrot.lane.b32.xlu0 %v212, 64
    %v215 = vpop.permute.xlu0 %214
    %v217 = vmul.f32 %v200, %v215
    %s218 = scalar_lea.vmem [#allocation2], 2
    %v219 = vld [vmem:[%s218] sm:$0x3]
    %221 = vrot.lane.b32.xlu0 %v217, 32
    %v222 = vpop.permute.xlu0 %221
    %v223 = vsel %vm155, %v222, 0
    %225 = vmatpush.msra.mxu0 0.0
    %226 = vmatpush.msra.mxu0 0.0
    %227 = vmatpush.msra.mxu0 0.0
    %228 = vmatpush.msra.mxu0 0.0
    %229 = vmatpush.msra.mxu0 0.0
    %230 = vmatpush.msra.mxu0 0.0
    %231 = vmatpush.msra.mxu0 0.0
    %232 = vmatpush.msra.mxu0 0.0
    %233 = vmatpush.msra.mxu0 0.0
    %234 = vmatpush.msra.mxu0 0.0
    %235 = vmatpush.msra.mxu0 0.0
    %236 = vmatpush.msra.mxu0 0.0
    %237 = vmatpush.msra.mxu0 %v50
    %238 = vmatpush.msra.mxu0 %v49
    %239 = vmatpush.msra.mxu0 %v48
    %240 = vmatpush.msra.mxu0 %v47
    %241 = vmatmul.f32.gmra.mxu0 %v223
    %v242 = vpop.f32.mrf.mxu0
    %v243 = vadd.f32 0.0, %v242
    %244 = vdwg.mxu0
    %v245 = vadd.f32 %v219, %v243
    %v246 = vtanh.pop %v245
    %v247 = vxor.u32 %v245, 2147483648
    %v248 = vmul.f32 %v247, 1.442695
    %v249 = vpow.pop %v248
    %v250 = vadd.f32 %v249, 1.0
    %v251 = vrcp.pop %v250
    %v252 = vmul.f32 %v250, %v251
    %v253 = vsub.f32 1.0, %v252
    %v254 = vmul.f32 %v251, %v253
    %v255 = vadd.f32 %v251, %v254
    %vm256 = vweird.f32 %v250
    %vm257 = vweird.f32 %v251
    %vm258 = vmor %vm256, %vm257
    %v259 = vsel %vm258, %v251, %v255
    %v260 = vand.u32 2147483647, %v250
    %vm261 = vcmp.eq.f32.partialorder %v260, 8.507059e+37
    %v262 = vand.u32 %v250, 2147483648
    %v263 = vor.u32 1.1754944e-38, %v262
    %v264 = vsel %vm261, %v263, %v259
    %v265 = vmul.f32 1.0, %v264
    %v266 = vsel %vm153, %v246, %v265
    %v267 = vmul.f32 %v266, %v211
    %269 = vrot.lane.b32.xlu0 %v266, 64
    %v270 = vpop.permute.xlu0 %269
    %v272 = vmul.f32 %v266, %v270
    %274 = vrot.lane.b32.xlu0 %v272, 32
    %v275 = vpop.permute.xlu0 %274
    %v277 = vadd.f32 %v267, %v275
    %v278 = vtanh.pop %v277
    %280 = vrot.lane.b32.xlu0 %v278, 64
    %v281 = vpop.permute.xlu0 %280
    %v283 = vmul.f32 %v266, %v281
    %v285 = vsel %vm155, %v222, 0.0
    %v287 = vperm.slane %v59, 0
    %vm289 = vcmask 523264
    %v291 = vsel %vm289, %v285, 0
    %293 = vmatpush.msra.mxu0 0.0
    %294 = vmatpush.msra.mxu0 0.0
    %295 = vmatpush.msra.mxu0 0.0
    %296 = vmatpush.msra.mxu0 0.0
    %297 = vmatpush.msra.mxu0 0.0
    %298 = vmatpush.msra.mxu0 0.0
    %299 = vmatpush.msra.mxu0 0.0
    %300 = vmatpush.msra.mxu0 0.0
    %301 = vmatpush.msra.mxu0 %v58
    %302 = vmatpush.msra.mxu0 %v57
    %303 = vmatpush.msra.mxu0 %v56
    %304 = vmatpush.msra.mxu0 %v55
    %305 = vmatpush.msra.mxu0 %v54
    %306 = vmatpush.msra.mxu0 %v53
    %307 = vmatpush.msra.mxu0 %v52
    %308 = vmatpush.msra.mxu0 %v51
    %309 = vmatmul.f32.gmra.mxu0 %v291
    %v310 = vpop.f32.mrf.mxu0
    %v311 = vadd.f32 %v287, %v310
    %312 = vdwg.mxu0
    %v313 = vtanh.pop %v311
    %v314 = vxor.u32 %v311, 2147483648
    %v315 = vmul.f32 %v314, 1.442695
    %v316 = vpow.pop %v315
    %v317 = vadd.f32 %v316, 1.0
    %v318 = vrcp.pop %v317
    %v319 = vmul.f32 %v317, %v318
    %v320 = vsub.f32 1.0, %v319
    %v321 = vmul.f32 %v318, %v320
    %v322 = vadd.f32 %v318, %v321
    %vm323 = vweird.f32 %v317
    %vm324 = vweird.f32 %v318
    %vm325 = vmor %vm323, %vm324
    %v326 = vsel %vm325, %v318, %v322
    %v327 = vand.u32 2147483647, %v317
    %vm328 = vcmp.eq.f32.partialorder %v327, 8.507059e+37
    %v329 = vand.u32 %v317, 2147483648
    %v330 = vor.u32 1.1754944e-38, %v329
    %v331 = vsel %vm328, %v330, %v326
    %v332 = vmul.f32 1.0, %v331
    %v333 = vsel %vm153, %v313, %v332
    %v334 = vmul.f32 %v333, 0.0
    %336 = vrot.lane.b32.xlu0 %v333, 64
    %v337 = vpop.permute.xlu0 %336
    %v339 = vmul.f32 %v333, %v337
    %341 = vrot.lane.b32.xlu0 %v339, 32
    %v342 = vpop.permute.xlu0 %341
    %v344 = vadd.f32 %v334, %v342
    %v345 = vtanh.pop %v344
    %347 = vrot.lane.b32.xlu0 %v345, 64
    %v348 = vpop.permute.xlu0 %347
    %v350 = vmul.f32 %v333, %v348
    %s351 = scalar_lea.vmem [#allocation2], 4
    %v352 = vld [vmem:[%s351] sm:$0x3]
    %354 = vrot.lane.b32.xlu0 %v283, 32
    %v355 = vpop.permute.xlu0 %354
    %v356 = vsel %vm155, %v355, 0
    %358 = vmatpush.msra.mxu0 0.0
    %359 = vmatpush.msra.mxu0 0.0
    %360 = vmatpush.msra.mxu0 0.0
    %361 = vmatpush.msra.mxu0 0.0
    %362 = vmatpush.msra.mxu0 0.0
    %363 = vmatpush.msra.mxu0 0.0
    %364 = vmatpush.msra.mxu0 0.0
    %365 = vmatpush.msra.mxu0 0.0
    %366 = vmatpush.msra.mxu0 0.0
    %367 = vmatpush.msra.mxu0 0.0
    %368 = vmatpush.msra.mxu0 0.0
    %369 = vmatpush.msra.mxu0 0.0
    %370 = vmatpush.msra.mxu0 %v50
    %371 = vmatpush.msra.mxu0 %v49
    %372 = vmatpush.msra.mxu0 %v48
    %373 = vmatpush.msra.mxu0 %v47
    %374 = vmatmul.f32.gmra.mxu0 %v356
    %v375 = vpop.f32.mrf.mxu0
    %v376 = vadd.f32 0.0, %v375
    %377 = vdwg.mxu0
    %v378 = vadd.f32 %v352, %v376
    %v379 = vtanh.pop %v378
    %v380 = vxor.u32 %v378, 2147483648
    %v381 = vmul.f32 %v380, 1.442695
    %v382 = vpow.pop %v381
    %v383 = vadd.f32 %v382, 1.0
    %v384 = vrcp.pop %v383
    %v385 = vmul.f32 %v383, %v384
    %v386 = vsub.f32 1.0, %v385
    %v387 = vmul.f32 %v384, %v386
    %v388 = vadd.f32 %v384, %v387
    %vm389 = vweird.f32 %v383
    %vm390 = vweird.f32 %v384
    %vm391 = vmor %vm389, %vm390
    %v392 = vsel %vm391, %v384, %v388
    %v393 = vand.u32 2147483647, %v383
    %vm394 = vcmp.eq.f32.partialorder %v393, 8.507059e+37
    %v395 = vand.u32 %v383, 2147483648
    %v396 = vor.u32 1.1754944e-38, %v395
    %v397 = vsel %vm394, %v396, %v392
    %v398 = vmul.f32 1.0, %v397
    %v399 = vsel %vm153, %v379, %v398
    %v400 = vmul.f32 %v399, %v277
    %402 = vrot.lane.b32.xlu0 %v399, 64
    %v403 = vpop.permute.xlu0 %402
    %v405 = vmul.f32 %v399, %v403
    %407 = vrot.lane.b32.xlu0 %v405, 32
    %v408 = vpop.permute.xlu0 %407
    %v410 = vadd.f32 %v400, %v408
    %v411 = vtanh.pop %v410
    %413 = vrot.lane.b32.xlu0 %v411, 64
    %v414 = vpop.permute.xlu0 %413
    %v416 = vmul.f32 %v399, %v414
    %419 = vrot.lane.b32.xlu0 %v350, 64
    %v420 = vpop.permute.xlu0 %419
    %v422 = vsel %vm155, %v355, %v420
    %v424 = vsel %vm289, %v422, 0
    %426 = vmatpush.msra.mxu0 0.0
    %427 = vmatpush.msra.mxu0 0.0
    %428 = vmatpush.msra.mxu0 0.0
    %429 = vmatpush.msra.mxu0 0.0
    %430 = vmatpush.msra.mxu0 0.0
    %431 = vmatpush.msra.mxu0 0.0
    %432 = vmatpush.msra.mxu0 0.0
    %433 = vmatpush.msra.mxu0 0.0
    %434 = vmatpush.msra.mxu0 %v58
    %435 = vmatpush.msra.mxu0 %v57
    %436 = vmatpush.msra.mxu0 %v56
    %437 = vmatpush.msra.mxu0 %v55
    %438 = vmatpush.msra.mxu0 %v54
    %439 = vmatpush.msra.mxu0 %v53
    %440 = vmatpush.msra.mxu0 %v52
    %441 = vmatpush.msra.mxu0 %v51
    %442 = vmatmul.f32.gmra.mxu0 %v424
    %v443 = vpop.f32.mrf.mxu0
    %v444 = vadd.f32 %v287, %v443
    %445 = vdwg.mxu0
    %v446 = vtanh.pop %v444
    %v447 = vxor.u32 %v444, 2147483648
    %v448 = vmul.f32 %v447, 1.442695
    %v449 = vpow.pop %v448
    %v450 = vadd.f32 %v449, 1.0
    %v451 = vrcp.pop %v450
    %v452 = vmul.f32 %v450, %v451
    %v453 = vsub.f32 1.0, %v452
    %v454 = vmul.f32 %v451, %v453
    %v455 = vadd.f32 %v451, %v454
    %vm456 = vweird.f32 %v450
    %vm457 = vweird.f32 %v451
    %vm458 = vmor %vm456, %vm457
    %v459 = vsel %vm458, %v451, %v455
    %v460 = vand.u32 2147483647, %v450
    %vm461 = vcmp.eq.f32.partialorder %v460, 8.507059e+37
    %v462 = vand.u32 %v450, 2147483648
    %v463 = vor.u32 1.1754944e-38, %v462
    %v464 = vsel %vm461, %v463, %v459
    %v465 = vmul.f32 1.0, %v464
    %v466 = vsel %vm153, %v446, %v465
    %v467 = vmul.f32 %v466, %v344
    %469 = vrot.lane.b32.xlu0 %v466, 64
    %v470 = vpop.permute.xlu0 %469
    %v472 = vmul.f32 %v466, %v470
    %474 = vrot.lane.b32.xlu0 %v472, 32
    %v475 = vpop.permute.xlu0 %474
    %v477 = vadd.f32 %v467, %v475
    %v478 = vtanh.pop %v477
    %480 = vrot.lane.b32.xlu0 %v478, 64
    %v481 = vpop.permute.xlu0 %480
    %v483 = vmul.f32 %v466, %v481
    %s484 = scalar_lea.vmem [#allocation2], 6
    %v485 = vld [vmem:[%s484] sm:$0x3]
    %487 = vrot.lane.b32.xlu0 %v416, 32
    %v488 = vpop.permute.xlu0 %487
    %v489 = vsel %vm155, %v488, 0
    %491 = vmatpush.msra.mxu0 0.0
    %492 = vmatpush.msra.mxu0 0.0
    %493 = vmatpush.msra.mxu0 0.0
    %494 = vmatpush.msra.mxu0 0.0
    %495 = vmatpush.msra.mxu0 0.0
    %496 = vmatpush.msra.mxu0 0.0
    %497 = vmatpush.msra.mxu0 0.0
    %498 = vmatpush.msra.mxu0 0.0
    %499 = vmatpush.msra.mxu0 0.0
    %500 = vmatpush.msra.mxu0 0.0
    %501 = vmatpush.msra.mxu0 0.0
    %502 = vmatpush.msra.mxu0 0.0
    %503 = vmatpush.msra.mxu0 %v50
    %504 = vmatpush.msra.mxu0 %v49
    %505 = vmatpush.msra.mxu0 %v48
    %506 = vmatpush.msra.mxu0 %v47
    %507 = vmatmul.f32.gmra.mxu0 %v489
    %v508 = vpop.f32.mrf.mxu0
    %v509 = vadd.f32 0.0, %v508
    %510 = vdwg.mxu0
    %v511 = vadd.f32 %v485, %v509
    %v512 = vtanh.pop %v511
    %v513 = vxor.u32 %v511, 2147483648
    %v514 = vmul.f32 %v513, 1.442695
    %v515 = vpow.pop %v514
    %v516 = vadd.f32 %v515, 1.0
    %v517 = vrcp.pop %v516
    %v518 = vmul.f32 %v516, %v517
    %v519 = vsub.f32 1.0, %v518
    %v520 = vmul.f32 %v517, %v519
    %v521 = vadd.f32 %v517, %v520
    %vm522 = vweird.f32 %v516
    %vm523 = vweird.f32 %v517
    %vm524 = vmor %vm522, %vm523
    %v525 = vsel %vm524, %v517, %v521
    %v526 = vand.u32 2147483647, %v516
    %vm527 = vcmp.eq.f32.partialorder %v526, 8.507059e+37
    %v528 = vand.u32 %v516, 2147483648
    %v529 = vor.u32 1.1754944e-38, %v528
    %v530 = vsel %vm527, %v529, %v525
    %v531 = vmul.f32 1.0, %v530
    %v532 = vsel %vm153, %v512, %v531
    %v533 = vmul.f32 %v532, %v410
    %535 = vrot.lane.b32.xlu0 %v532, 64
    %v536 = vpop.permute.xlu0 %535
    %v538 = vmul.f32 %v532, %v536
    %540 = vrot.lane.b32.xlu0 %v538, 32
    %v541 = vpop.permute.xlu0 %540
    %v543 = vadd.f32 %v533, %v541
    %v544 = vtanh.pop %v543
    %546 = vrot.lane.b32.xlu0 %v544, 64
    %v547 = vpop.permute.xlu0 %546
    %v549 = vmul.f32 %v532, %v547
    %552 = vrot.lane.b32.xlu0 %v483, 64
    %v553 = vpop.permute.xlu0 %552
    %v555 = vsel %vm155, %v488, %v553
    %v557 = vsel %vm289, %v555, 0
    %559 = vmatpush.msra.mxu0 0.0
    %560 = vmatpush.msra.mxu0 0.0
    %561 = vmatpush.msra.mxu0 0.0
    %562 = vmatpush.msra.mxu0 0.0
    %563 = vmatpush.msra.mxu0 0.0
    %564 = vmatpush.msra.mxu0 0.0
    %565 = vmatpush.msra.mxu0 0.0
    %566 = vmatpush.msra.mxu0 0.0
    %567 = vmatpush.msra.mxu0 %v58
    %568 = vmatpush.msra.mxu0 %v57
    %569 = vmatpush.msra.mxu0 %v56
    %570 = vmatpush.msra.mxu0 %v55
    %571 = vmatpush.msra.mxu0 %v54
    %572 = vmatpush.msra.mxu0 %v53
    %573 = vmatpush.msra.mxu0 %v52
    %574 = vmatpush.msra.mxu0 %v51
    %575 = vmatmul.f32.gmra.mxu0 %v557
    %v576 = vpop.f32.mrf.mxu0
    %v577 = vadd.f32 %v287, %v576
    %578 = vdwg.mxu0
    %v579 = vtanh.pop %v577
    %v580 = vxor.u32 %v577, 2147483648
    %v581 = vmul.f32 %v580, 1.442695
    %v582 = vpow.pop %v581
    %v583 = vadd.f32 %v582, 1.0
    %v584 = vrcp.pop %v583
    %v585 = vmul.f32 %v583, %v584
    %v586 = vsub.f32 1.0, %v585
    %v587 = vmul.f32 %v584, %v586
    %v588 = vadd.f32 %v584, %v587
    %vm589 = vweird.f32 %v583
    %vm590 = vweird.f32 %v584
    %vm591 = vmor %vm589, %vm590
    %v592 = vsel %vm591, %v584, %v588
    %v593 = vand.u32 2147483647, %v583
    %vm594 = vcmp.eq.f32.partialorder %v593, 8.507059e+37
    %v595 = vand.u32 %v583, 2147483648
    %v596 = vor.u32 1.1754944e-38, %v595
    %v597 = vsel %vm594, %v596, %v592
    %v598 = vmul.f32 1.0, %v597
    %v599 = vsel %vm153, %v579, %v598
    %v600 = vmul.f32 %v599, %v477
    %602 = vrot.lane.b32.xlu0 %v599, 64
    %v603 = vpop.permute.xlu0 %602
    %v605 = vmul.f32 %v599, %v603
    %607 = vrot.lane.b32.xlu0 %v605, 32
    %v608 = vpop.permute.xlu0 %607
    %v610 = vadd.f32 %v600, %v608
    %v611 = vtanh.pop %v610
    %613 = vrot.lane.b32.xlu0 %v611, 64
    %v614 = vpop.permute.xlu0 %613
    %v616 = vmul.f32 %v599, %v614
    %s617 = scalar_lea.vmem [#allocation2], 8
    %v618 = vld [vmem:[%s617] sm:$0x3]
    %620 = vrot.lane.b32.xlu0 %v549, 32
    %v621 = vpop.permute.xlu0 %620
    %v622 = vsel %vm155, %v621, 0
    %624 = vmatpush.msra.mxu0 0.0
    %625 = vmatpush.msra.mxu0 0.0
    %626 = vmatpush.msra.mxu0 0.0
    %627 = vmatpush.msra.mxu0 0.0
    %628 = vmatpush.msra.mxu0 0.0
    %629 = vmatpush.msra.mxu0 0.0
    %630 = vmatpush.msra.mxu0 0.0
    %631 = vmatpush.msra.mxu0 0.0
    %632 = vmatpush.msra.mxu0 0.0
    %633 = vmatpush.msra.mxu0 0.0
    %634 = vmatpush.msra.mxu0 0.0
    %635 = vmatpush.msra.mxu0 0.0
    %636 = vmatpush.msra.mxu0 %v50
    %637 = vmatpush.msra.mxu0 %v49
    %638 = vmatpush.msra.mxu0 %v48
    %639 = vmatpush.msra.mxu0 %v47
    %640 = vmatmul.f32.gmra.mxu0 %v622
    %v641 = vpop.f32.mrf.mxu0
    %v642 = vadd.f32 0.0, %v641
    %643 = vdwg.mxu0
    %v644 = vadd.f32 %v618, %v642
    %v645 = vtanh.pop %v644
    %v646 = vxor.u32 %v644, 2147483648
    %v647 = vmul.f32 %v646, 1.442695
    %v648 = vpow.pop %v647
    %v649 = vadd.f32 %v648, 1.0
    %v650 = vrcp.pop %v649
    %v651 = vmul.f32 %v649, %v650
    %v652 = vsub.f32 1.0, %v651
    %v653 = vmul.f32 %v650, %v652
    %v654 = vadd.f32 %v650, %v653
    %vm655 = vweird.f32 %v649
    %vm656 = vweird.f32 %v650
    %vm657 = vmor %vm655, %vm656
    %v658 = vsel %vm657, %v650, %v654
    %v659 = vand.u32 2147483647, %v649
    %vm660 = vcmp.eq.f32.partialorder %v659, 8.507059e+37
    %v661 = vand.u32 %v649, 2147483648
    %v662 = vor.u32 1.1754944e-38, %v661
    %v663 = vsel %vm660, %v662, %v658
    %v664 = vmul.f32 1.0, %v663
    %v665 = vsel %vm153, %v645, %v664
    %v666 = vmul.f32 %v665, %v543
    %668 = vrot.lane.b32.xlu0 %v665, 64
    %v669 = vpop.permute.xlu0 %668
    %v671 = vmul.f32 %v665, %v669
    %673 = vrot.lane.b32.xlu0 %v671, 32
    %v674 = vpop.permute.xlu0 %673
    %v676 = vadd.f32 %v666, %v674
    %v677 = vtanh.pop %v676
    %679 = vrot.lane.b32.xlu0 %v677, 64
    %v680 = vpop.permute.xlu0 %679
    %v682 = vmul.f32 %v665, %v680
    %685 = vrot.lane.b32.xlu0 %v616, 64
    %v686 = vpop.permute.xlu0 %685
    %v688 = vsel %vm155, %v621, %v686
    %v690 = vsel %vm289, %v688, 0
    %692 = vmatpush.msra.mxu0 0.0
    %693 = vmatpush.msra.mxu0 0.0
    %694 = vmatpush.msra.mxu0 0.0
    %695 = vmatpush.msra.mxu0 0.0
    %696 = vmatpush.msra.mxu0 0.0
    %697 = vmatpush.msra.mxu0 0.0
    %698 = vmatpush.msra.mxu0 0.0
    %699 = vmatpush.msra.mxu0 0.0
    %700 = vmatpush.msra.mxu0 %v58
    %701 = vmatpush.msra.mxu0 %v57
    %702 = vmatpush.msra.mxu0 %v56
    %703 = vmatpush.msra.mxu0 %v55
    %704 = vmatpush.msra.mxu0 %v54
    %705 = vmatpush.msra.mxu0 %v53
    %706 = vmatpush.msra.mxu0 %v52
    %707 = vmatpush.msra.mxu0 %v51
    %708 = vmatmul.f32.gmra.mxu0 %v690
    %v709 = vpop.f32.mrf.mxu0
    %v710 = vadd.f32 %v287, %v709
    %711 = vdwg.mxu0
    %v712 = vtanh.pop %v710
    %v713 = vxor.u32 %v710, 2147483648
    %v714 = vmul.f32 %v713, 1.442695
    %v715 = vpow.pop %v714
    %v716 = vadd.f32 %v715, 1.0
    %v717 = vrcp.pop %v716
    %v718 = vmul.f32 %v716, %v717
    %v719 = vsub.f32 1.0, %v718
    %v720 = vmul.f32 %v717, %v719
    %v721 = vadd.f32 %v717, %v720
    %vm722 = vweird.f32 %v716
    %vm723 = vweird.f32 %v717
    %vm724 = vmor %vm722, %vm723
    %v725 = vsel %vm724, %v717, %v721
    %v726 = vand.u32 2147483647, %v716
    %vm727 = vcmp.eq.f32.partialorder %v726, 8.507059e+37
    %v728 = vand.u32 %v716, 2147483648
    %v729 = vor.u32 1.1754944e-38, %v728
    %v730 = vsel %vm727, %v729, %v725
    %v731 = vmul.f32 1.0, %v730
    %v732 = vsel %vm153, %v712, %v731
    %v733 = vmul.f32 %v732, %v610
    %735 = vrot.lane.b32.xlu0 %v732, 64
    %v736 = vpop.permute.xlu0 %735
    %v738 = vmul.f32 %v732, %v736
    %740 = vrot.lane.b32.xlu0 %v738, 32
    %v741 = vpop.permute.xlu0 %740
    %v743 = vadd.f32 %v733, %v741
    %v744 = vtanh.pop %v743
    %746 = vrot.lane.b32.xlu0 %v744, 64
    %v747 = vpop.permute.xlu0 %746
    %v749 = vmul.f32 %v732, %v747
    %s750 = scalar_lea.vmem [#allocation2], 10
    %v751 = vld [vmem:[%s750] sm:$0x3]
    %753 = vrot.lane.b32.xlu0 %v682, 32
    %v754 = vpop.permute.xlu0 %753
    %v755 = vsel %vm155, %v754, 0
    %757 = vmatpush.msra.mxu0 0.0
    %758 = vmatpush.msra.mxu0 0.0
    %759 = vmatpush.msra.mxu0 0.0
    %760 = vmatpush.msra.mxu0 0.0
    %761 = vmatpush.msra.mxu0 0.0
    %762 = vmatpush.msra.mxu0 0.0
    %763 = vmatpush.msra.mxu0 0.0
    %764 = vmatpush.msra.mxu0 0.0
    %765 = vmatpush.msra.mxu0 0.0
    %766 = vmatpush.msra.mxu0 0.0
    %767 = vmatpush.msra.mxu0 0.0
    %768 = vmatpush.msra.mxu0 0.0
    %769 = vmatpush.msra.mxu0 %v50
    %770 = vmatpush.msra.mxu0 %v49
    %771 = vmatpush.msra.mxu0 %v48
    %772 = vmatpush.msra.mxu0 %v47
    %773 = vmatmul.f32.gmra.mxu0 %v755
    %v774 = vpop.f32.mrf.mxu0
    %v775 = vadd.f32 0.0, %v774
    %776 = vdwg.mxu0
    %v777 = vadd.f32 %v751, %v775
    %v778 = vtanh.pop %v777
    %v779 = vxor.u32 %v777, 2147483648
    %v780 = vmul.f32 %v779, 1.442695
    %v781 = vpow.pop %v780
    %v782 = vadd.f32 %v781, 1.0
    %v783 = vrcp.pop %v782
    %v784 = vmul.f32 %v782, %v783
    %v785 = vsub.f32 1.0, %v784
    %v786 = vmul.f32 %v783, %v785
    %v787 = vadd.f32 %v783, %v786
    %vm788 = vweird.f32 %v782
    %vm789 = vweird.f32 %v783
    %vm790 = vmor %vm788, %vm789
    %v791 = vsel %vm790, %v783, %v787
    %v792 = vand.u32 2147483647, %v782
    %vm793 = vcmp.eq.f32.partialorder %v792, 8.507059e+37
    %v794 = vand.u32 %v782, 2147483648
    %v795 = vor.u32 1.1754944e-38, %v794
    %v796 = vsel %vm793, %v795, %v791
    %v797 = vmul.f32 1.0, %v796
    %v798 = vsel %vm153, %v778, %v797
    %v799 = vmul.f32 %v798, %v676
    %801 = vrot.lane.b32.xlu0 %v798, 64
    %v802 = vpop.permute.xlu0 %801
    %v804 = vmul.f32 %v798, %v802
    %806 = vrot.lane.b32.xlu0 %v804, 32
    %v807 = vpop.permute.xlu0 %806
    %v809 = vadd.f32 %v799, %v807
    %v810 = vtanh.pop %v809
    %812 = vrot.lane.b32.xlu0 %v810, 64
    %v813 = vpop.permute.xlu0 %812
    %v815 = vmul.f32 %v798, %v813
    %818 = vrot.lane.b32.xlu0 %v749, 64
    %v819 = vpop.permute.xlu0 %818
    %v821 = vsel %vm155, %v754, %v819
    %v823 = vsel %vm289, %v821, 0
    %825 = vmatpush.msra.mxu0 0.0
    %826 = vmatpush.msra.mxu0 0.0
    %827 = vmatpush.msra.mxu0 0.0
    %828 = vmatpush.msra.mxu0 0.0
    %829 = vmatpush.msra.mxu0 0.0
    %830 = vmatpush.msra.mxu0 0.0
    %831 = vmatpush.msra.mxu0 0.0
    %832 = vmatpush.msra.mxu0 0.0
    %833 = vmatpush.msra.mxu0 %v58
    %834 = vmatpush.msra.mxu0 %v57
    %835 = vmatpush.msra.mxu0 %v56
    %836 = vmatpush.msra.mxu0 %v55
    %837 = vmatpush.msra.mxu0 %v54
    %838 = vmatpush.msra.mxu0 %v53
    %839 = vmatpush.msra.mxu0 %v52
    %840 = vmatpush.msra.mxu0 %v51
    %841 = vmatmul.f32.gmra.mxu0 %v823
    %v842 = vpop.f32.mrf.mxu0
    %v843 = vadd.f32 %v287, %v842
    %844 = vdwg.mxu0
    %v845 = vtanh.pop %v843
    %v846 = vxor.u32 %v843, 2147483648
    %v847 = vmul.f32 %v846, 1.442695
    %v848 = vpow.pop %v847
    %v849 = vadd.f32 %v848, 1.0
    %v850 = vrcp.pop %v849
    %v851 = vmul.f32 %v849, %v850
    %v852 = vsub.f32 1.0, %v851
    %v853 = vmul.f32 %v850, %v852
    %v854 = vadd.f32 %v850, %v853
    %vm855 = vweird.f32 %v849
    %vm856 = vweird.f32 %v850
    %vm857 = vmor %vm855, %vm856
    %v858 = vsel %vm857, %v850, %v854
    %v859 = vand.u32 2147483647, %v849
    %vm860 = vcmp.eq.f32.partialorder %v859, 8.507059e+37
    %v861 = vand.u32 %v849, 2147483648
    %v862 = vor.u32 1.1754944e-38, %v861
    %v863 = vsel %vm860, %v862, %v858
    %v864 = vmul.f32 1.0, %v863
    %v865 = vsel %vm153, %v845, %v864
    %v866 = vmul.f32 %v865, %v743
    %868 = vrot.lane.b32.xlu0 %v865, 64
    %v869 = vpop.permute.xlu0 %868
    %v871 = vmul.f32 %v865, %v869
    %873 = vrot.lane.b32.xlu0 %v871, 32
    %v874 = vpop.permute.xlu0 %873
    %v876 = vadd.f32 %v866, %v874
    %v877 = vtanh.pop %v876
    %879 = vrot.lane.b32.xlu0 %v877, 64
    %v880 = vpop.permute.xlu0 %879
    %v882 = vmul.f32 %v865, %v880
    %s883 = scalar_lea.vmem [#allocation2], 12
    %v884 = vld [vmem:[%s883] sm:$0x3]
    %886 = vrot.lane.b32.xlu0 %v815, 32
    %v887 = vpop.permute.xlu0 %886
    %v888 = vsel %vm155, %v887, 0
    %890 = vmatpush.msra.mxu0 0.0
    %891 = vmatpush.msra.mxu0 0.0
    %892 = vmatpush.msra.mxu0 0.0
    %893 = vmatpush.msra.mxu0 0.0
    %894 = vmatpush.msra.mxu0 0.0
    %895 = vmatpush.msra.mxu0 0.0
    %896 = vmatpush.msra.mxu0 0.0
    %897 = vmatpush.msra.mxu0 0.0
    %898 = vmatpush.msra.mxu0 0.0
    %899 = vmatpush.msra.mxu0 0.0
    %900 = vmatpush.msra.mxu0 0.0
    %901 = vmatpush.msra.mxu0 0.0
    %902 = vmatpush.msra.mxu0 %v50
    %903 = vmatpush.msra.mxu0 %v49
    %904 = vmatpush.msra.mxu0 %v48
    %905 = vmatpush.msra.mxu0 %v47
    %906 = vmatmul.f32.gmra.mxu0 %v888
    %v907 = vpop.f32.mrf.mxu0
    %v908 = vadd.f32 0.0, %v907
    %909 = vdwg.mxu0
    %v910 = vadd.f32 %v884, %v908
    %v911 = vtanh.pop %v910
    %v912 = vxor.u32 %v910, 2147483648
    %v913 = vmul.f32 %v912, 1.442695
    %v914 = vpow.pop %v913
    %v915 = vadd.f32 %v914, 1.0
    %v916 = vrcp.pop %v915
    %v917 = vmul.f32 %v915, %v916
    %v918 = vsub.f32 1.0, %v917
    %v919 = vmul.f32 %v916, %v918
    %v920 = vadd.f32 %v916, %v919
    %vm921 = vweird.f32 %v915
    %vm922 = vweird.f32 %v916
    %vm923 = vmor %vm921, %vm922
    %v924 = vsel %vm923, %v916, %v920
    %v925 = vand.u32 2147483647, %v915
    %vm926 = vcmp.eq.f32.partialorder %v925, 8.507059e+37
    %v927 = vand.u32 %v915, 2147483648
    %v928 = vor.u32 1.1754944e-38, %v927
    %v929 = vsel %vm926, %v928, %v924
    %v930 = vmul.f32 1.0, %v929
    %v931 = vsel %vm153, %v911, %v930
    %v932 = vmul.f32 %v931, %v809
    %934 = vrot.lane.b32.xlu0 %v931, 64
    %v935 = vpop.permute.xlu0 %934
    %v937 = vmul.f32 %v931, %v935
    %939 = vrot.lane.b32.xlu0 %v937, 32
    %v940 = vpop.permute.xlu0 %939
    %v942 = vadd.f32 %v932, %v940
    %v943 = vtanh.pop %v942
    %945 = vrot.lane.b32.xlu0 %v943, 64
    %v946 = vpop.permute.xlu0 %945
    %v948 = vmul.f32 %v931, %v946
    %951 = vrot.lane.b32.xlu0 %v882, 64
    %v952 = vpop.permute.xlu0 %951
    %v954 = vsel %vm155, %v887, %v952
    %v956 = vsel %vm289, %v954, 0
    %958 = vmatpush.msra.mxu0 0.0
    %959 = vmatpush.msra.mxu0 0.0
    %960 = vmatpush.msra.mxu0 0.0
    %961 = vmatpush.msra.mxu0 0.0
    %962 = vmatpush.msra.mxu0 0.0
    %963 = vmatpush.msra.mxu0 0.0
    %964 = vmatpush.msra.mxu0 0.0
    %965 = vmatpush.msra.mxu0 0.0
    %966 = vmatpush.msra.mxu0 %v58
    %967 = vmatpush.msra.mxu0 %v57
    %968 = vmatpush.msra.mxu0 %v56
    %969 = vmatpush.msra.mxu0 %v55
    %970 = vmatpush.msra.mxu0 %v54
    %971 = vmatpush.msra.mxu0 %v53
    %972 = vmatpush.msra.mxu0 %v52
    %973 = vmatpush.msra.mxu0 %v51
    %974 = vmatmul.f32.gmra.mxu0 %v956
    %v975 = vpop.f32.mrf.mxu0
    %v976 = vadd.f32 %v287, %v975
    %977 = vdwg.mxu0
    %v978 = vtanh.pop %v976
    %v979 = vxor.u32 %v976, 2147483648
    %v980 = vmul.f32 %v979, 1.442695
    %v981 = vpow.pop %v980
    %v982 = vadd.f32 %v981, 1.0
    %v983 = vrcp.pop %v982
    %v984 = vmul.f32 %v982, %v983
    %v985 = vsub.f32 1.0, %v984
    %v986 = vmul.f32 %v983, %v985
    %v987 = vadd.f32 %v983, %v986
    %vm988 = vweird.f32 %v982
    %vm989 = vweird.f32 %v983
    %vm990 = vmor %vm988, %vm989
    %v991 = vsel %vm990, %v983, %v987
    %v992 = vand.u32 2147483647, %v982
    %vm993 = vcmp.eq.f32.partialorder %v992, 8.507059e+37
    %v994 = vand.u32 %v982, 2147483648
    %v995 = vor.u32 1.1754944e-38, %v994
    %v996 = vsel %vm993, %v995, %v991
    %v997 = vmul.f32 1.0, %v996
    %v998 = vsel %vm153, %v978, %v997
    %v999 = vmul.f32 %v998, %v876
    %1001 = vrot.lane.b32.xlu0 %v998, 64
    %v1002 = vpop.permute.xlu0 %1001
    %v1004 = vmul.f32 %v998, %v1002
    %1006 = vrot.lane.b32.xlu0 %v1004, 32
    %v1007 = vpop.permute.xlu0 %1006
    %v1009 = vadd.f32 %v999, %v1007
    %v1010 = vtanh.pop %v1009
    %1012 = vrot.lane.b32.xlu0 %v1010, 64
    %v1013 = vpop.permute.xlu0 %1012
    %v1015 = vmul.f32 %v998, %v1013
    %s1016 = scalar_lea.vmem [#allocation2], 14
    %v1017 = vld [vmem:[%s1016] sm:$0x3]
    %1019 = vrot.lane.b32.xlu0 %v948, 32
    %v1020 = vpop.permute.xlu0 %1019
    %v1021 = vsel %vm155, %v1020, 0
    %1023 = vmatpush.msra.mxu0 0.0
    %1024 = vmatpush.msra.mxu0 0.0
    %1025 = vmatpush.msra.mxu0 0.0
    %1026 = vmatpush.msra.mxu0 0.0
    %1027 = vmatpush.msra.mxu0 0.0
    %1028 = vmatpush.msra.mxu0 0.0
    %1029 = vmatpush.msra.mxu0 0.0
    %1030 = vmatpush.msra.mxu0 0.0
    %1031 = vmatpush.msra.mxu0 0.0
    %1032 = vmatpush.msra.mxu0 0.0
    %1033 = vmatpush.msra.mxu0 0.0
    %1034 = vmatpush.msra.mxu0 0.0
    %1035 = vmatpush.msra.mxu0 %v50
    %1036 = vmatpush.msra.mxu0 %v49
    %1037 = vmatpush.msra.mxu0 %v48
    %1038 = vmatpush.msra.mxu0 %v47
    %1039 = vmatmul.f32.gmra.mxu0 %v1021
    %v1040 = vpop.f32.mrf.mxu0
    %v1041 = vadd.f32 0.0, %v1040
    %1042 = vdwg.mxu0
    %v1043 = vadd.f32 %v1017, %v1041
    %v1044 = vtanh.pop %v1043
    %v1045 = vxor.u32 %v1043, 2147483648
    %v1046 = vmul.f32 %v1045, 1.442695
    %v1047 = vpow.pop %v1046
    %v1048 = vadd.f32 %v1047, 1.0
    %v1049 = vrcp.pop %v1048
    %v1050 = vmul.f32 %v1048, %v1049
    %v1051 = vsub.f32 1.0, %v1050
    %v1052 = vmul.f32 %v1049, %v1051
    %v1053 = vadd.f32 %v1049, %v1052
    %vm1054 = vweird.f32 %v1048
    %vm1055 = vweird.f32 %v1049
    %vm1056 = vmor %vm1054, %vm1055
    %v1057 = vsel %vm1056, %v1049, %v1053
    %v1058 = vand.u32 2147483647, %v1048
    %vm1059 = vcmp.eq.f32.partialorder %v1058, 8.507059e+37
    %v1060 = vand.u32 %v1048, 2147483648
    %v1061 = vor.u32 1.1754944e-38, %v1060
    %v1062 = vsel %vm1059, %v1061, %v1057
    %v1063 = vmul.f32 1.0, %v1062
    %v1064 = vsel %vm153, %v1044, %v1063
    %v1065 = vmul.f32 %v1064, %v942
    %1067 = vrot.lane.b32.xlu0 %v1064, 64
    %v1068 = vpop.permute.xlu0 %1067
    %v1070 = vmul.f32 %v1064, %v1068
    %1072 = vrot.lane.b32.xlu0 %v1070, 32
    %v1073 = vpop.permute.xlu0 %1072
    %v1075 = vadd.f32 %v1065, %v1073
    %v1076 = vtanh.pop %v1075
    %1078 = vrot.lane.b32.xlu0 %v1076, 64
    %v1079 = vpop.permute.xlu0 %1078
    %v1081 = vmul.f32 %v1064, %v1079
    %1084 = vrot.lane.b32.xlu0 %v1015, 64
    %v1085 = vpop.permute.xlu0 %1084
    %v1087 = vsel %vm155, %v1020, %v1085
    %v1089 = vsel %vm289, %v1087, 0
    %1091 = vmatpush.msra.mxu0 0.0
    %1092 = vmatpush.msra.mxu0 0.0
    %1093 = vmatpush.msra.mxu0 0.0
    %1094 = vmatpush.msra.mxu0 0.0
    %1095 = vmatpush.msra.mxu0 0.0
    %1096 = vmatpush.msra.mxu0 0.0
    %1097 = vmatpush.msra.mxu0 0.0
    %1098 = vmatpush.msra.mxu0 0.0
    %1099 = vmatpush.msra.mxu0 %v58
    %1100 = vmatpush.msra.mxu0 %v57
    %1101 = vmatpush.msra.mxu0 %v56
    %1102 = vmatpush.msra.mxu0 %v55
    %1103 = vmatpush.msra.mxu0 %v54
    %1104 = vmatpush.msra.mxu0 %v53
    %1105 = vmatpush.msra.mxu0 %v52
    %1106 = vmatpush.msra.mxu0 %v51
    %1107 = vmatmul.f32.gmra.mxu0 %v1089
    %v1108 = vpop.f32.mrf.mxu0
    %v1109 = vadd.f32 %v287, %v1108
    %1110 = vdwg.mxu0
    %v1111 = vtanh.pop %v1109
    %v1112 = vxor.u32 %v1109, 2147483648
    %v1113 = vmul.f32 %v1112, 1.442695
    %v1114 = vpow.pop %v1113
    %v1115 = vadd.f32 %v1114, 1.0
    %v1116 = vrcp.pop %v1115
    %v1117 = vmul.f32 %v1115, %v1116
    %v1118 = vsub.f32 1.0, %v1117
    %v1119 = vmul.f32 %v1116, %v1118
    %v1120 = vadd.f32 %v1116, %v1119
    %vm1121 = vweird.f32 %v1115
    %vm1122 = vweird.f32 %v1116
    %vm1123 = vmor %vm1121, %vm1122
    %v1124 = vsel %vm1123, %v1116, %v1120
    %v1125 = vand.u32 2147483647, %v1115
    %vm1126 = vcmp.eq.f32.partialorder %v1125, 8.507059e+37
    %v1127 = vand.u32 %v1115, 2147483648
    %v1128 = vor.u32 1.1754944e-38, %v1127
    %v1129 = vsel %vm1126, %v1128, %v1124
    %v1130 = vmul.f32 1.0, %v1129
    %v1131 = vsel %vm153, %v1111, %v1130
    %v1132 = vmul.f32 %v1131, %v1009
    %1134 = vrot.lane.b32.xlu0 %v1131, 64
    %v1135 = vpop.permute.xlu0 %1134
    %v1137 = vmul.f32 %v1131, %v1135
    %1139 = vrot.lane.b32.xlu0 %v1137, 32
    %v1140 = vpop.permute.xlu0 %1139
    %v1142 = vadd.f32 %v1132, %v1140
    %v1143 = vtanh.pop %v1142
    %1145 = vrot.lane.b32.xlu0 %v1143, 64
    %v1146 = vpop.permute.xlu0 %1145
    %v1148 = vmul.f32 %v1131, %v1146
    %1150 = vrot.lane.b32.xlu0 %v1081, 32
    %v1151 = vpop.permute.xlu0 %1150
    %1154 = vrot.lane.b32.xlu0 %v1148, 64
    %v1155 = vpop.permute.xlu0 %1154
    %v1157 = vsel %vm155, %v1151, %v1155
    %v1159 = vsel %vm289, %v1157, 0
    %1161 = vmatpush.msra.mxu0 0.0
    %1162 = vmatpush.msra.mxu0 0.0
    %1163 = vmatpush.msra.mxu0 0.0
    %1164 = vmatpush.msra.mxu0 0.0
    %1165 = vmatpush.msra.mxu0 0.0
    %1166 = vmatpush.msra.mxu0 0.0
    %1167 = vmatpush.msra.mxu0 0.0
    %1168 = vmatpush.msra.mxu0 0.0
    %1169 = vmatpush.msra.mxu0 %v58
    %1170 = vmatpush.msra.mxu0 %v57
    %1171 = vmatpush.msra.mxu0 %v56
    %1172 = vmatpush.msra.mxu0 %v55
    %1173 = vmatpush.msra.mxu0 %v54
    %1174 = vmatpush.msra.mxu0 %v53
    %1175 = vmatpush.msra.mxu0 %v52
    %1176 = vmatpush.msra.mxu0 %v51
    %1177 = vmatmul.f32.gmra.mxu0 %v1159
    %v1178 = vpop.f32.mrf.mxu0
    %v1179 = vadd.f32 %v287, %v1178
    %1180 = vdwg.mxu0
    %v1181 = vtanh.pop %v1179
    %v1182 = vxor.u32 %v1179, 2147483648
    %v1183 = vmul.f32 %v1182, 1.442695
    %v1184 = vpow.pop %v1183
    %v1185 = vadd.f32 %v1184, 1.0
    %v1186 = vrcp.pop %v1185
    %v1187 = vmul.f32 %v1185, %v1186
    %v1188 = vsub.f32 1.0, %v1187
    %v1189 = vmul.f32 %v1186, %v1188
    %v1190 = vadd.f32 %v1186, %v1189
    %vm1191 = vweird.f32 %v1185
    %vm1192 = vweird.f32 %v1186
    %vm1193 = vmor %vm1191, %vm1192
    %v1194 = vsel %vm1193, %v1186, %v1190
    %v1195 = vand.u32 2147483647, %v1185
    %vm1196 = vcmp.eq.f32.partialorder %v1195, 8.507059e+37
    %v1197 = vand.u32 %v1185, 2147483648
    %v1198 = vor.u32 1.1754944e-38, %v1197
    %v1199 = vsel %vm1196, %v1198, %v1194
    %v1200 = vmul.f32 1.0, %v1199
    %v1201 = vsel %vm153, %v1181, %v1200
    %v1202 = vmul.f32 %v1201, %v1142
    %1204 = vrot.lane.b32.xlu0 %v1201, 64
    %v1205 = vpop.permute.xlu0 %1204
    %v1207 = vmul.f32 %v1201, %v1205
    %1209 = vrot.lane.b32.xlu0 %v1207, 32
    %v1210 = vpop.permute.xlu0 %1209
    %v1212 = vadd.f32 %v1202, %v1210
    %v1213 = vtanh.pop %v1212
    %1215 = vrot.lane.b32.xlu0 %v1213, 64
    %v1216 = vpop.permute.xlu0 %1215
    %v1218 = vmul.f32 %v1201, %v1216
    %v1219 = vld [vmem:[%s6] sm:$0xff]
    %v1220 = vld [vmem:[%s6 + $0x8] sm:$0xff]
    %v1221 = vld [vmem:[%s6 + $0x10] sm:$0xff]
    %v1222 = vld [vmem:[%s6 + $0x18] sm:$0xff]
    %v1223 = vld [vmem:[#allocation3] sm:$0x1]
    %v1225 = vperm.slane %v1223, 0
    %1228 = vrot.lane.b32.xlu0 %v1218, 32
    %v1229 = vpop.permute.xlu0 %1228
    %v1230 = vsel %vm155, %v1229, 0
    %1232 = vmatpush.msra.mxu0 0.0
    %1233 = vmatpush.msra.mxu0 0.0
    %1234 = vmatpush.msra.mxu0 0.0
    %1235 = vmatpush.msra.mxu0 0.0
    %1236 = vmatpush.msra.mxu0 0.0
    %1237 = vmatpush.msra.mxu0 0.0
    %1238 = vmatpush.msra.mxu0 0.0
    %1239 = vmatpush.msra.mxu0 0.0
    %1240 = vmatpush.msra.mxu0 0.0
    %1241 = vmatpush.msra.mxu0 0.0
    %1242 = vmatpush.msra.mxu0 0.0
    %1243 = vmatpush.msra.mxu0 0.0
    %1244 = vmatpush.msra.mxu0 %v1222
    %1245 = vmatpush.msra.mxu0 %v1221
    %1246 = vmatpush.msra.mxu0 %v1220
    %1247 = vmatpush.msra.mxu0 %v1219
    %1248 = vmatmul.f32.gmra.mxu0 %v1230
    %v1249 = vpop.f32.mrf.mxu0
    %v1250 = vadd.f32 %v1225, %v1249
    %1251 = vdwg.mxu0
    %vm1252 = vcmask 1024
    %1253 = vst.msk [vmem:[%s8] sm:$0x3] %vm1252, %v1250
    // Predicated region
    $region38: #{tpu_custom_call.1} parent=1 // pred_check
      _
    $region39: #{tpu_custom_call.1} parent=1 // pred_check_branch
      %1255 = sbr.rel (0) target = $region41
    $region40: #{tpu_custom_call.1} parent=1 // pred_region
      _
    $region41: #{tpu_custom_call.1} parent=1 // pred_fallthru
      _
    // Predicated region
    $region42: #{tpu_custom_call.1} parent=1 // pred_check
      _
    $region43: #{tpu_custom_call.1} parent=1 // pred_check_branch
      %1257 = sbr.rel (0) target = $region45
    $region44: #{tpu_custom_call.1} parent=1 // pred_region
      _
    $region45: #{tpu_custom_call.1} parent=1 // pred_fallthru
      _
    %1258 = vsyncpa [#allocation5], 1

</llo_original>
